<compile_context>
chip_gen: v7x
topology: tpu7x:2x2x1
jax: 0.10.0
libtpu: 0.0.40
codegen_flags: <defaults>
</compile_context>

<pallas_src>
import functools

import jax
import jax.numpy as jnp
from jax.experimental import pallas as pl
from jax.experimental.pallas import tpu as pltpu

LANE = 128                   # TPU vreg lane width
DEFAULT_BLOCK_BATCH = 16384  # batch tile on the lane axis (review: amortize the
                             # ~0.35 us/step pipeline overhead; ~26 MiB peak VMEM)


def _cdiv(a: int, b: int) -> int:
    return -(-a // b)


def _round_up(n: int, m: int) -> int:
    return _cdiv(n, m) * m


def _default_use_bf16() -> bool:
    """bf16 VPU elementwise is a win on v6e / v7x, a loss on v5e and older."""
    try:
        kind = jax.devices()[0].device_kind.lower()
    except Exception:
        return False
    if "tpu" not in kind:
        return False
    return not any(old in kind for old in ("v2", "v3", "v4", "v5"))


def _mlp_kernel(x_ref, w1_ref, w2_ref, w3_ref, b_ref, o_ref):
    """One batch tile; batch is on the lane (last) axis for h1 / h2 / out."""
    act_dtype = w1_ref.dtype                  # bf16 when the fast path is enabled
    matmul_precision = (jax.lax.Precision.HIGHEST
                        if act_dtype == jnp.float32 else None)

    x = x_ref[...]                            # [tb, feat], f32 straight from HBM
    if x.dtype != act_dtype:
        x = x.astype(act_dtype)

    b1 = b_ref[0:64, :].astype(act_dtype)     # [64, 1]
    b2 = b_ref[64:96, :].astype(act_dtype)    # [32, 1]
    b3 = b_ref[96:97, :]                      # [1, 1]  (kept f32)

    # Linear(feat -> 64) + ReLU.  Contract the feature axis of both operands
    # (the "A @ B^T" MXU pattern) so no wrapper-side transpose of x is needed:
    # [64, feat] x [tb, feat] -> [64, tb], batch on lanes.
    h1 = jax.lax.dot_general(w1_ref[...], x, (((1,), (1,)), ((), ())),
                             preferred_element_type=act_dtype,
                             precision=matmul_precision)
    h1 = jnp.maximum(h1 + b1, 0.0)

    # Dropout(p=0.3): identity in eval mode.
    # TODO(synk): training-mode dropout (pltpu.prng_seed + prng_random_bits mask,
    #             scaled by 1/(1-p)) not implemented.

    # Linear(64 -> 32) + ReLU:  [32, 64] @ [64, tb] -> [32, tb]  (MXU).
    h2 = jnp.dot(w2_ref[...], h1, preferred_element_type=act_dtype,
                 precision=matmul_precision)
    h2 = jnp.maximum(h2 + b2, 0.0)

    # Linear(32 -> 1): VPU broadcast-mul + sublane reduce -> [1, tb].
    # w3_ref is f32, so the products and the 32-term reduction run in f32 even
    # when the activations are bf16.
    prod = h2 * w3_ref[...]
    out = jnp.sum(prod, axis=0, keepdims=True) + b3
    o_ref[...] = out.astype(o_ref.dtype)       # lane-dense [1, tb] store


@functools.partial(jax.jit, static_argnames=("block_batch", "use_bf16"))
def complexity_predictor_forward(x, params, block_batch: int = DEFAULT_BLOCK_BATCH,
                                 use_bf16=None):
    """x: [batch, input_features] f32 -> [batch, 1] f32 (eval-mode forward)."""
    if use_bf16 is None:
        use_bf16 = _default_use_bf16()
    act_dtype = jnp.bfloat16 if use_bf16 else jnp.float32

    w1, b1, w2, b2, w3, b3 = params            # PyTorch layouts: W [out, in], b [out]
    batch, feat = x.shape

    # ---- tiny wrapper-side prep (O(weights) only; no O(batch) HBM passes) ----
    w1c = w1.astype(act_dtype)
    w2c = w2.astype(act_dtype)
    w3_col = w3.reshape(-1, 1).astype(jnp.float32)        # [32, 1]
    b_packed = jnp.zeros((LANE, 1), jnp.float32)          # one DMA for all biases
    b_packed = b_packed.at[0:64, 0].set(b1)
    b_packed = b_packed.at[64:96, 0].set(b2)
    b_packed = b_packed.at[96:97, 0].set(b3)

    # ---- batch tiling --------------------------------------------------------
    # Only tiny batches (< one lane group) get padded; the pad is O(128 rows).
    if batch < LANE:
        x_in = jnp.pad(x, ((0, LANE - batch), (0, 0)))
        padded_batch = LANE
    else:
        x_in = x
        padded_batch = batch

    # Balance tiles, lane-align, keep >=2 grid steps for large batches (v7x
    # megacore), and keep every block no larger than the array (ragged tail is
    # handled by Pallas boundary masking -- no jnp.pad full copy).
    n_steps = max(1, _cdiv(padded_batch, block_batch))
    if n_steps == 1 and padded_batch >= 2 * LANE:
        n_steps = 2
    tb = _round_up(_cdiv(padded_batch, n_steps), LANE)
    tb = min(tb, max(LANE, (padded_batch // LANE) * LANE))   # block <= array
    tb = min(tb, _round_up(block_batch, LANE))
    num_blocks = _cdiv(padded_batch, tb)

    # Advisory cost hint for XLA's scheduler (covers the actually executed work).
    covered = num_blocks * tb
    flops = covered * 2 * (feat * 64 + 64 * 32 + 32)
    bytes_accessed = (padded_batch * (feat + 1)
                      + 64 * feat + 32 * 64 + 32 + LANE) * 4

    out = pl.pallas_call(
        _mlp_kernel,
        out_shape=jax.ShapeDtypeStruct((1, padded_batch), jnp.float32),
        grid_spec=pltpu.PrefetchScalarGridSpec(
            num_scalar_prefetch=0,
            grid=(num_blocks,),
            in_specs=[
                pl.BlockSpec((tb, feat), lambda i: (i, 0)),   # x tile, untransposed
                pl.BlockSpec((64, feat), lambda i: (0, 0)),   # W1, VMEM resident
                pl.BlockSpec((32, 64), lambda i: (0, 0)),     # W2, resident
                pl.BlockSpec((32, 1), lambda i: (0, 0)),      # W3 column, resident
                pl.BlockSpec((LANE, 1), lambda i: (0, 0)),    # packed biases, resident
            ],
            out_specs=pl.BlockSpec((1, tb), lambda i: (0, i)),  # lane-dense output slab
        ),
        compiler_params=pltpu.CompilerParams(
            dimension_semantics=("parallel",),     # batch tiles shard across v7x TCs
            vmem_limit_bytes=64 * 1024 * 1024,     # big tile also fits on v5e
        ),
        cost_estimate=pl.CostEstimate(
            flops=flops, transcendentals=0, bytes_accessed=bytes_accessed),
    )(x_in, w1c, w2c, w3_col, b_packed)

    return out[0, :batch].reshape(batch, 1)


def init_params(key, input_features: int = 8):
    """PyTorch-style nn.Linear init: uniform(-1/sqrt(fan_in), +1/sqrt(fan_in)).

    Returns (w1[64,feat], b1[64], w2[32,64], b2[32], w3[1,32], b3[1]) in the
    PyTorch [out, in] layout.
    """
    def linear_init(k, fan_in, fan_out):
        kw, kb = jax.random.split(k)
        bound = 1.0 / jnp.sqrt(float(fan_in))
        w = jax.random.uniform(kw, (fan_out, fan_in), jnp.float32, -bound, bound)
        b = jax.random.uniform(kb, (fan_out,), jnp.float32, -bound, bound)
        return w, b

    k1, k2, k3 = jax.random.split(key, 3)
    w1, b1 = linear_init(k1, input_features, 64)
    w2, b2 = linear_init(k2, 64, 32)
    w3, b3 = linear_init(k3, 32, 1)
    return (w1, b1, w2, b2, w3, b3)


def _reference_forward(x, params):
    """Plain-JAX reference (eval mode: dropout = identity), full-precision dots."""
    w1, b1, w2, b2, w3, b3 = params
    hp = jax.lax.Precision.HIGHEST
    h = jnp.maximum(jnp.dot(x, w1.T, precision=hp) + b1, 0.0)
    h = jnp.maximum(jnp.dot(h, w2.T, precision=hp) + b2, 0.0)
    return jnp.dot(h, w3.T, precision=hp) + b3


if __name__ == "__main__":
    key = jax.random.PRNGKey(0)
    k_params, k_x1, k_x2 = jax.random.split(key, 3)

    input_features = 8
    params = init_params(k_params, input_features)

    # 1) Small batch, f32 path (single padded tile).
    batch = 8
    x = jax.random.normal(k_x1, (batch, input_features), jnp.float32)
    out = jax.block_until_ready(
        complexity_predictor_forward(x, params, use_bf16=False))
    ref = _reference_forward(x, params)
    assert out.shape == (batch, 1), out.shape
    assert jnp.allclose(out, ref, atol=5e-3, rtol=5e-3), \
        float(jnp.max(jnp.abs(out - ref)))

    # 2) Non-lane-aligned batch with a small block_batch: multiple grid steps and
    #    a ragged tail (exercises pipelining + boundary masking, f32 path).
    batch2 = 333
    x2 = jax.random.normal(k_x2, (batch2, input_features), jnp.float32)
    out2 = jax.block_until_ready(
        complexity_predictor_forward(x2, params, block_batch=256, use_bf16=False))
    ref2 = _reference_forward(x2, params)
    assert out2.shape == (batch2, 1), out2.shape
    assert jnp.allclose(out2, ref2, atol=5e-3, rtol=5e-3), \
        float(jnp.max(jnp.abs(out2 - ref2)))

    # 3) Default (auto) settings: bf16 activation path on v6e/v7x, f32 elsewhere.
    out3 = jax.block_until_ready(complexity_predictor_forward(x2, params))
    assert out3.shape == (batch2, 1), out3.shape
    assert jnp.allclose(out3, ref2, atol=1e-1, rtol=1e-1), \
        float(jnp.max(jnp.abs(out3 - ref2)))

    print("KERNEL_OK")
</pallas_src>

<mosaic_0001>
module attributes {stable_mosaic.version = 11 : i64} {
  func.func @_mlp_kernel(%arg0: i32, %arg1: memref<128x8xf32, #tpu.memory_space<vmem>>, %arg2: memref<64x8xf32, #tpu.memory_space<vmem>>, %arg3: memref<32x64xf32, #tpu.memory_space<vmem>>, %arg4: memref<32x1xf32, #tpu.memory_space<vmem>>, %arg5: memref<128x1xf32, #tpu.memory_space<vmem>>, %arg6: memref<1x128xf32, #tpu.memory_space<vmem>>) attributes {dimension_semantics = [#tpu.dimension_semantics<parallel>], iteration_bounds = array<i64: 1>, scalar_prefetch = 0 : i64, scratch_operands = 0 : i64, tpu.core_type = #tpu.core_type<tc>, window_params = [{transform_indices = @transform_0, window_bounds = array<i64: 128, 8>}, {pipeline_mode = #tpu.pipeline_mode<synchronous>, transform_indices = @transform_1, window_bounds = array<i64: 64, 8>}, {pipeline_mode = #tpu.pipeline_mode<synchronous>, transform_indices = @transform_2, window_bounds = array<i64: 32, 64>}, {pipeline_mode = #tpu.pipeline_mode<synchronous>, transform_indices = @transform_3, window_bounds = array<i64: 32, 1>}, {pipeline_mode = #tpu.pipeline_mode<synchronous>, transform_indices = @transform_4, window_bounds = array<i64: 128, 1>}, {transform_indices = @transform_5, window_bounds = array<i64: 1, 128>}]} {
    %c0 = arith.constant 0 : index
    %c0_0 = arith.constant 0 : index
    %0 = vector.load %arg1[%c0, %c0_0] : memref<128x8xf32, #tpu.memory_space<vmem>>, vector<128x8xf32>
    %c0_1 = arith.constant 0 : index
    %c0_2 = arith.constant 0 : index
    %1 = vector.load %arg5[%c0_1, %c0_2] : memref<128x1xf32, #tpu.memory_space<vmem>>, vector<64x1xf32>
    %c64 = arith.constant 64 : index
    %c0_3 = arith.constant 0 : index
    %2 = vector.load %arg5[%c64, %c0_3] : memref<128x1xf32, #tpu.memory_space<vmem>>, vector<32x1xf32>
    %c96 = arith.constant 96 : index
    %c0_4 = arith.constant 0 : index
    %3 = vector.load %arg5[%c96, %c0_4] : memref<128x1xf32, #tpu.memory_space<vmem>>, vector<1x1xf32>
    %c0_5 = arith.constant 0 : index
    %c0_6 = arith.constant 0 : index
    %4 = vector.load %arg2[%c0_5, %c0_6] : memref<64x8xf32, #tpu.memory_space<vmem>>, vector<64x8xf32>
    %cst = arith.constant dense<0.000000e+00> : vector<64x128xf32>
    %5 = tpu.matmul %4, %0, %cst {dimension_numbers = #tpu.dot_dimension_numbers<[1], [1], [0], [0], [0, 0, 1, 0], [], []>, precision = #tpu.contract_precision<fp32>} : vector<64x8xf32>, vector<128x8xf32>, vector<64x128xf32> -> vector<64x128xf32>
    %6 = vector.broadcast %1 : vector<64x1xf32> to vector<64x128xf32>
    %7 = arith.addf %5, %6 : vector<64x128xf32>
    %cst_7 = arith.constant 0.000000e+00 : f32
    %8 = vector.broadcast %cst_7 : f32 to vector<64x128xf32>
    %9 = arith.maximumf %7, %8 : vector<64x128xf32>
    %c0_8 = arith.constant 0 : index
    %c0_9 = arith.constant 0 : index
    %10 = vector.load %arg3[%c0_8, %c0_9] : memref<32x64xf32, #tpu.memory_space<vmem>>, vector<32x64xf32>
    %cst_10 = arith.constant dense<0.000000e+00> : vector<32x128xf32>
    %11 = tpu.matmul %10, %9, %cst_10 {dimension_numbers = #tpu.dot_dimension_numbers<[1], [0], [0], [1], [0, 0, 1, 1], [], []>, precision = #tpu.contract_precision<fp32>} : vector<32x64xf32>, vector<64x128xf32>, vector<32x128xf32> -> vector<32x128xf32>
    %12 = vector.broadcast %2 : vector<32x1xf32> to vector<32x128xf32>
    %13 = arith.addf %11, %12 : vector<32x128xf32>
    %cst_11 = arith.constant 0.000000e+00 : f32
    %14 = vector.broadcast %cst_11 : f32 to vector<32x128xf32>
    %15 = arith.maximumf %13, %14 : vector<32x128xf32>
    %c0_12 = arith.constant 0 : index
    %c0_13 = arith.constant 0 : index
    %16 = vector.load %arg4[%c0_12, %c0_13] : memref<32x1xf32, #tpu.memory_space<vmem>>, vector<32x1xf32>
    %17 = vector.broadcast %16 : vector<32x1xf32> to vector<32x128xf32>
    %18 = arith.mulf %15, %17 : vector<32x128xf32>
    %cst_14 = arith.constant dense<0.000000e+00> : vector<128xf32>
    %19 = vector.multi_reduction <add>, %18, %cst_14 [0] : vector<32x128xf32> to vector<128xf32>
    %20 = vector.shape_cast %19 : vector<128xf32> to vector<1x128xf32>
    %21 = vector.broadcast %3 : vector<1x1xf32> to vector<1x128xf32>
    %22 = arith.addf %20, %21 : vector<1x128xf32>
    %c0_15 = arith.constant 0 : index
    %c0_16 = arith.constant 0 : index
    %23 = vector.load %arg6[%c0_15, %c0_16] : memref<1x128xf32, #tpu.memory_space<vmem>>, vector<1x128xf32>
    tpu.vector_store %arg6[%c0_15, %c0_16], %22 {strides = array<i32>} : memref<1x128xf32, #tpu.memory_space<vmem>>, vector<1x128xf32>,
    return
  }
  func.func @transform_0(%arg0: i32) -> (i32, i32) {
    %c0_i32 = arith.constant 0 : i32
    %c0_i32_0 = arith.constant 0 : i32
    return %arg0, %c0_i32 : i32, i32
  }
  func.func @transform_1(%arg0: i32) -> (i32, i32) {
    %c0_i32 = arith.constant 0 : i32
    %c0_i32_0 = arith.constant 0 : i32
    %c0_i32_1 = arith.constant 0 : i32
    return %c0_i32, %c0_i32_0 : i32, i32
  }
  func.func @transform_2(%arg0: i32) -> (i32, i32) {
    %c0_i32 = arith.constant 0 : i32
    %c0_i32_0 = arith.constant 0 : i32
    %c0_i32_1 = arith.constant 0 : i32
    return %c0_i32, %c0_i32_0 : i32, i32
  }
  func.func @transform_3(%arg0: i32) -> (i32, i32) {
    %c0_i32 = arith.constant 0 : i32
    %c0_i32_0 = arith.constant 0 : i32
    %c0_i32_1 = arith.constant 0 : i32
    return %c0_i32, %c0_i32_0 : i32, i32
  }
  func.func @transform_4(%arg0: i32) -> (i32, i32) {
    %c0_i32 = arith.constant 0 : i32
    %c0_i32_0 = arith.constant 0 : i32
    %c0_i32_1 = arith.constant 0 : i32
    return %c0_i32, %c0_i32_0 : i32, i32
  }
  func.func @transform_5(%arg0: i32) -> (i32, i32) {
    %c0_i32 = arith.constant 0 : i32
    %c0_i32_0 = arith.constant 0 : i32
    return %c0_i32, %arg0 : i32, i32
  }
}

</mosaic_0001>

<llo_original>
// kernel: complexity_predictor_forward.1
$region0: #{complexity_predictor_forward.1}
  #allocation0 [shape = 'u32[]', space=smem, size = 0x4, offset = 0x4, fixed_abs, tag = 'smem constant byte address 0x4 - core index']
  #allocation1 [shape = 'u32[144,128]{1,0:T(1,128)}', space=vmem, size = 0x12000, scoped, tag = 'internal scratch']
  %s0 = inlined_call_operand.hbm [shape: f32[128,8], index: 0, kind: input, shape index: {}]
  %s1 = inlined_call_operand.hbm [shape: f32[64,8], index: 1, kind: input, shape index: {}]
  %s2 = inlined_call_operand.hbm [shape: f32[32,64], index: 2, kind: input, shape index: {}]
  %s3 = inlined_call_operand.hbm [shape: f32[32,1], index: 3, kind: input, shape index: {}]
  %s4 = inlined_call_operand.hbm [shape: f32[128,1], index: 4, kind: input, shape index: {}]
  %s5 = inlined_call_operand.hbm [shape: f32[1,128], index: 5, kind: output, shape index: {}]
  %s6 = sld [smem:[#allocation0]]
  $region50: #{complexity_predictor_forward.1} parent=0
    _
  %s8 = ssub.s32 1, %s6
  %s9 = scalar_select 0, %s8, %s6
  $region1: #{complexity_predictor_forward.1} parent=0
    #allocation2 [shape = 'u8[65536]{0}', space=vmem, size = 0x10000, scoped, tag = 'input window, operand 0, single buffered']
    #allocation3 [shape = 's32[1]{0}', space=sflag, size = 0x4, scoped, tag = 'scoped memory for complexity_predictor_forward.1']
    #allocation4 [shape = 's32[1]{0}', space=sflag, size = 0x4, scoped, tag = 'scoped memory for complexity_predictor_forward.1']
    #allocation5 [shape = 'u8[32768]{0}', space=vmem, size = 0x8000, scoped, tag = 'input window, operand 1, single buffered']
    #allocation6 [shape = 's32[1]{0}', space=sflag, size = 0x4, scoped, tag = 'scoped memory for complexity_predictor_forward.1']
    #allocation7 [shape = 'u8[16384]{0}', space=vmem, size = 0x4000, scoped, tag = 'input window, operand 2, single buffered']
    #allocation8 [shape = 'u8[16384]{0}', space=vmem, size = 0x4000, scoped, tag = 'input window, operand 3, single buffered']
    #allocation9 [shape = 's32[1]{0}', space=sflag, size = 0x4, scoped, tag = 'scoped memory for complexity_predictor_forward.1']
    #allocation10 [shape = 'u8[65536]{0}', space=vmem, size = 0x10000, scoped, tag = 'input window, operand 4, single buffered']
    #allocation11 [shape = 'u8[512]{0}', space=vmem, size = 0x400, scoped, tag = 'output window, operand 0, single buffered']
    %10 = vsyncpa [#allocation3], 0
    %11 = vsyncpa [#allocation6], 0
    %12 = vsyncpa [#allocation9], 0
    %13 = vsyncpa [#allocation4], 0
    // Predicated region
    $region2: #{complexity_predictor_forward.1} parent=1 // pred_check
      _
    $region3: #{complexity_predictor_forward.1} parent=1 // pred_check_branch
      %15 = sbr.rel (0) target = $region5
    $region4: #{complexity_predictor_forward.1} parent=1 // pred_region
      %s17 = ssub.s32 2048, 2048
      %18 = vsyncadd [#allocation3], %s17
      %s19 = sshll.u32 [#allocation2], 4
      %s20 = int_to_ptr.vmem [resolvable:$true] %s19
      %25 = dma.hbm_to_vmem [thread:$0]  %s0, 2048, %s20, [#allocation3], 128, 128, 8
    $region5: #{complexity_predictor_forward.1} parent=1 // pred_fallthru
      _
    // Predicated region
    $region6: #{complexity_predictor_forward.1} parent=1 // pred_check
      _
    $region7: #{complexity_predictor_forward.1} parent=1 // pred_check_branch
      %27 = sbr.rel (0) target = $region9
    $region8: #{complexity_predictor_forward.1} parent=1 // pred_region
      %s29 = ssub.s32 1024, 1024
      %30 = vsyncadd [#allocation6], %s29
      %s31 = sshll.u32 [#allocation5], 4
      %s32 = int_to_ptr.vmem [resolvable:$true] %s31
      %37 = dma.hbm_to_vmem [thread:$0]  %s1, 1024, %s32, [#allocation6], 128, 128, 8
    $region9: #{complexity_predictor_forward.1} parent=1 // pred_fallthru
      _
    // Predicated region
    $region10: #{complexity_predictor_forward.1} parent=1 // pred_check
      _
    $region11: #{complexity_predictor_forward.1} parent=1 // pred_check_branch
      %39 = sbr.rel (0) target = $region13
    $region12: #{complexity_predictor_forward.1} parent=1 // pred_region
      %s41 = ssub.s32 512, 512
      %42 = vsyncadd [#allocation6], %s41
      %s43 = sshll.u32 [#allocation7], 4
      %s44 = int_to_ptr.vmem [resolvable:$true] %s43
      %49 = dma.hbm_to_vmem [thread:$0]  %s2, 512, %s44, [#allocation6], 128, 128, 8
    $region13: #{complexity_predictor_forward.1} parent=1 // pred_fallthru
      _
    // Predicated region
    $region14: #{complexity_predictor_forward.1} parent=1 // pred_check
      _
    $region15: #{complexity_predictor_forward.1} parent=1 // pred_check_branch
      %51 = sbr.rel (0) target = $region17
    $region16: #{complexity_predictor_forward.1} parent=1 // pred_region
      %s53 = ssub.s32 512, 512
      %54 = vsyncadd [#allocation9], %s53
      %s55 = sshll.u32 [#allocation8], 4
      %s56 = int_to_ptr.vmem [resolvable:$true] %s55
      %61 = dma.hbm_to_vmem [thread:$0]  %s3, 512, %s56, [#allocation9], 128, 128, 8
    $region17: #{complexity_predictor_forward.1} parent=1 // pred_fallthru
      _
    // Predicated region
    $region18: #{complexity_predictor_forward.1} parent=1 // pred_check
      _
    $region19: #{complexity_predictor_forward.1} parent=1 // pred_check_branch
      %63 = sbr.rel (0) target = $region21
    $region20: #{complexity_predictor_forward.1} parent=1 // pred_region
      %s65 = ssub.s32 2048, 2048
      %66 = vsyncadd [#allocation9], %s65
      %s67 = sshll.u32 [#allocation10], 4
      %s68 = int_to_ptr.vmem [resolvable:$true] %s67
      %73 = dma.hbm_to_vmem [thread:$0]  %s4, 2048, %s68, [#allocation9], 128, 128, 8
    $region21: #{complexity_predictor_forward.1} parent=1 // pred_fallthru
      _
    // Predicated region
    $region22: #{complexity_predictor_forward.1} parent=1 // pred_check
      _
    $region23: #{complexity_predictor_forward.1} parent=1 // pred_check_branch
      %75 = sbr.rel (0) target = $region25
    $region24: #{complexity_predictor_forward.1} parent=1 // pred_region
      %76 = dma.done [#allocation3], 2048
    $region25: #{complexity_predictor_forward.1} parent=1 // pred_fallthru
      _
    // Predicated region
    $region26: #{complexity_predictor_forward.1} parent=1 // pred_check
      _
    $region27: #{complexity_predictor_forward.1} parent=1 // pred_check_branch
      %78 = sbr.rel (0) target = $region29
    $region28: #{complexity_predictor_forward.1} parent=1 // pred_region
      %79 = dma.done [#allocation6], 1024
    $region29: #{complexity_predictor_forward.1} parent=1 // pred_fallthru
      _
    // Predicated region
    $region30: #{complexity_predictor_forward.1} parent=1 // pred_check
      _
    $region31: #{complexity_predictor_forward.1} parent=1 // pred_check_branch
      %81 = sbr.rel (0) target = $region33
    $region32: #{complexity_predictor_forward.1} parent=1 // pred_region
      %82 = dma.done [#allocation6], 512
    $region33: #{complexity_predictor_forward.1} parent=1 // pred_fallthru
      _
    // Predicated region
    $region34: #{complexity_predictor_forward.1} parent=1 // pred_check
      _
    $region35: #{complexity_predictor_forward.1} parent=1 // pred_check_branch
      %84 = sbr.rel (0) target = $region37
    $region36: #{complexity_predictor_forward.1} parent=1 // pred_region
      %85 = dma.done [#allocation9], 512
    $region37: #{complexity_predictor_forward.1} parent=1 // pred_fallthru
      _
    // Predicated region
    $region38: #{complexity_predictor_forward.1} parent=1 // pred_check
      _
    $region39: #{complexity_predictor_forward.1} parent=1 // pred_check_branch
      %87 = sbr.rel (0) target = $region41
    $region40: #{complexity_predictor_forward.1} parent=1 // pred_region
      %88 = dma.done [#allocation9], 2048
    $region41: #{complexity_predictor_forward.1} parent=1 // pred_fallthru
      _
    %v89 = vld [vmem:[#allocation2] sm:$0xff]
    %v90 = vld [vmem:[#allocation2 + $0x8] sm:$0xff]
    %v91 = vld [vmem:[#allocation2 + $0x10] sm:$0xff]
    %v92 = vld [vmem:[#allocation2 + $0x18] sm:$0xff]
    %v93 = vld [vmem:[#allocation2 + $0x20] sm:$0xff]
    %v94 = vld [vmem:[#allocation2 + $0x28] sm:$0xff]
    %v95 = vld [vmem:[#allocation2 + $0x30] sm:$0xff]
    %v96 = vld [vmem:[#allocation2 + $0x38] sm:$0xff]
    %v97 = vld [vmem:[#allocation2 + $0x40] sm:$0xff]
    %v98 = vld [vmem:[#allocation2 + $0x48] sm:$0xff]
    %v99 = vld [vmem:[#allocation2 + $0x50] sm:$0xff]
    %v100 = vld [vmem:[#allocation2 + $0x58] sm:$0xff]
    %v101 = vld [vmem:[#allocation2 + $0x60] sm:$0xff]
    %v102 = vld [vmem:[#allocation2 + $0x68] sm:$0xff]
    %v103 = vld [vmem:[#allocation2 + $0x70] sm:$0xff]
    %v104 = vld [vmem:[#allocation2 + $0x78] sm:$0xff]
    %v105 = vld [vmem:[#allocation10] sm:$0xff]
    %v106 = vld [vmem:[#allocation10 + $0x8] sm:$0xff]
    %v107 = vld [vmem:[#allocation10 + $0x10] sm:$0xff]
    %v108 = vld [vmem:[#allocation10 + $0x18] sm:$0xff]
    %v109 = vld [vmem:[#allocation10 + $0x20] sm:$0xff]
    %v110 = vld [vmem:[#allocation10 + $0x28] sm:$0xff]
    %v111 = vld [vmem:[#allocation10 + $0x30] sm:$0xff]
    %v112 = vld [vmem:[#allocation10 + $0x38] sm:$0xff]
    %v113 = vld [vmem:[#allocation10 + $0x40] sm:$0xff]
    %v114 = vld [vmem:[#allocation10 + $0x48] sm:$0xff]
    %v115 = vld [vmem:[#allocation10 + $0x50] sm:$0xff]
    %v116 = vld [vmem:[#allocation10 + $0x58] sm:$0xff]
    %v117 = vld [vmem:[#allocation10 + $0x60] sm:$0x1]
    %v118 = vld [vmem:[#allocation5] sm:$0xff]
    %v119 = vld [vmem:[#allocation5 + $0x8] sm:$0xff]
    %v120 = vld [vmem:[#allocation5 + $0x10] sm:$0xff]
    %v121 = vld [vmem:[#allocation5 + $0x18] sm:$0xff]
    %v122 = vld [vmem:[#allocation5 + $0x20] sm:$0xff]
    %v123 = vld [vmem:[#allocation5 + $0x28] sm:$0xff]
    %v124 = vld [vmem:[#allocation5 + $0x30] sm:$0xff]
    %v125 = vld [vmem:[#allocation5 + $0x38] sm:$0xff]
    %127 = vset.pattern.permute.xlu0 0
    %128 = vperm.xlu0 %127, %v105
    %v129 = vpop.permute.xlu0 %128
    %132 = vset.pattern.permute.xlu0 0
    %133 = vperm.xlu0 %132, %v106
    %v134 = vpop.permute.xlu0 %133
    %137 = vset.pattern.permute.xlu0 0
    %138 = vperm.xlu0 %137, %v107
    %v139 = vpop.permute.xlu0 %138
    %142 = vset.pattern.permute.xlu0 0
    %143 = vperm.xlu0 %142, %v108
    %v144 = vpop.permute.xlu0 %143
    %147 = vset.pattern.permute.xlu0 0
    %148 = vperm.xlu0 %147, %v109
    %v149 = vpop.permute.xlu0 %148
    %152 = vset.pattern.permute.xlu0 0
    %153 = vperm.xlu0 %152, %v110
    %v154 = vpop.permute.xlu0 %153
    %157 = vset.pattern.permute.xlu0 0
    %158 = vperm.xlu0 %157, %v111
    %v159 = vpop.permute.xlu0 %158
    %162 = vset.pattern.permute.xlu0 0
    %163 = vperm.xlu0 %162, %v112
    %v164 = vpop.permute.xlu0 %163
    %vm166 = vcmask 64512
    %v168 = vsel %vm166, %v118, 0
    %v171 = vsel %vm166, %v119, 0
    %v174 = vsel %vm166, %v120, 0
    %v177 = vsel %vm166, %v121, 0
    %v180 = vsel %vm166, %v122, 0
    %v183 = vsel %vm166, %v123, 0
    %v186 = vsel %vm166, %v124, 0
    %v189 = vsel %vm166, %v125, 0
    %v192 = vsel %vm166, %v89, 0
    %v195 = vsel %vm166, %v90, 0
    %v198 = vsel %vm166, %v91, 0
    %v201 = vsel %vm166, %v92, 0
    %v204 = vsel %vm166, %v93, 0
    %v207 = vsel %vm166, %v94, 0
    %v210 = vsel %vm166, %v95, 0
    %v213 = vsel %vm166, %v96, 0
    %v216 = vsel %vm166, %v97, 0
    %v219 = vsel %vm166, %v98, 0
    %v222 = vsel %vm166, %v99, 0
    %v225 = vsel %vm166, %v100, 0
    %v228 = vsel %vm166, %v101, 0
    %v231 = vsel %vm166, %v102, 0
    %v234 = vsel %vm166, %v103, 0
    %v237 = vsel %vm166, %v104, 0
    %239 = vmatprep.subr.mxu0 0.0
    %v240 = vand.u32 %v192, 4294901760
    %241 = vmatpush1.xpose.msra.mxu0 %v240
    %242 = vmatprep.subr.mxu0 0.0
    %v243 = vand.u32 %v195, 4294901760
    %244 = vmatpush1.xpose.msra.mxu0 %v243
    %245 = vmatprep.subr.mxu0 0.0
    %v246 = vand.u32 %v198, 4294901760
    %247 = vmatpush1.xpose.msra.mxu0 %v246
    %248 = vmatprep.subr.mxu0 0.0
    %v249 = vand.u32 %v201, 4294901760
    %250 = vmatpush1.xpose.msra.mxu0 %v249
    %251 = vmatprep.subr.mxu0 0.0
    %v252 = vand.u32 %v204, 4294901760
    %253 = vmatpush1.xpose.msra.mxu0 %v252
    %254 = vmatprep.subr.mxu0 0.0
    %v255 = vand.u32 %v207, 4294901760
    %256 = vmatpush1.xpose.msra.mxu0 %v255
    %257 = vmatprep.subr.mxu0 0.0
    %v258 = vand.u32 %v210, 4294901760
    %259 = vmatpush1.xpose.msra.mxu0 %v258
    %260 = vmatprep.subr.mxu0 0.0
    %v261 = vand.u32 %v213, 4294901760
    %262 = vmatpush1.xpose.msra.mxu0 %v261
    %263 = vmatprep.subr.mxu0 0.0
    %v264 = vand.u32 %v216, 4294901760
    %265 = vmatpush1.xpose.msra.mxu0 %v264
    %266 = vmatprep.subr.mxu0 0.0
    %v267 = vand.u32 %v219, 4294901760
    %268 = vmatpush1.xpose.msra.mxu0 %v267
    %269 = vmatprep.subr.mxu0 0.0
    %v270 = vand.u32 %v222, 4294901760
    %271 = vmatpush1.xpose.msra.mxu0 %v270
    %272 = vmatprep.subr.mxu0 0.0
    %v273 = vand.u32 %v225, 4294901760
    %274 = vmatpush1.xpose.msra.mxu0 %v273
    %275 = vmatprep.subr.mxu0 0.0
    %v276 = vand.u32 %v228, 4294901760
    %277 = vmatpush1.xpose.msra.mxu0 %v276
    %278 = vmatprep.subr.mxu0 0.0
    %v279 = vand.u32 %v231, 4294901760
    %280 = vmatpush1.xpose.msra.mxu0 %v279
    %281 = vmatprep.subr.mxu0 0.0
    %v282 = vand.u32 %v234, 4294901760
    %283 = vmatpush1.xpose.msra.mxu0 %v282
    %284 = vmatprep.subr.mxu0 0.0
    %v285 = vand.u32 %v237, 4294901760
    %286 = vmatpush1.xpose.msra.mxu0 %v285
    %287 = vmatprep.subr.mxu0 0.0
    %288 = vmatpush1.xpose.msra.mxu0 0.0
    %289 = vmatprep.subr.mxu0 0.0
    %290 = vmatpush1.xpose.msra.mxu0 0.0
    %291 = vmatprep.subr.mxu0 0.0
    %292 = vmatpush1.xpose.msra.mxu0 0.0
    %293 = vmatprep.subr.mxu0 0.0
    %294 = vmatpush1.xpose.msra.mxu0 0.0
    %295 = vmatprep.subr.mxu0 0.0
    %296 = vmatpush1.xpose.msra.mxu0 0.0
    %297 = vmatprep.subr.mxu0 0.0
    %298 = vmatpush1.xpose.msra.mxu0 0.0
    %299 = vmatprep.subr.mxu0 0.0
    %300 = vmatpush1.xpose.msra.mxu0 0.0
    %301 = vmatprep.subr.mxu0 0.0
    %302 = vmatpush1.xpose.msra.mxu0 0.0
    %303 = vmatprep.subr.mxu0 0.0
    %304 = vmatpush1.xpose.msra.mxu0 0.0
    %305 = vmatprep.subr.mxu0 0.0
    %306 = vmatpush1.xpose.msra.mxu0 0.0
    %307 = vmatprep.subr.mxu0 0.0
    %308 = vmatpush1.xpose.msra.mxu0 0.0
    %309 = vmatprep.subr.mxu0 0.0
    %310 = vmatpush1.xpose.msra.mxu0 0.0
    %311 = vmatprep.subr.mxu0 0.0
    %312 = vmatpush1.xpose.msra.mxu0 0.0
    %313 = vmatprep.subr.mxu0 0.0
    %314 = vmatpush1.xpose.msra.mxu0 0.0
    %315 = vmatprep.subr.mxu0 0.0
    %316 = vmatpush1.xpose.msra.mxu0 0.0
    %317 = vmatprep.subr.mxu0 0.0
    %318 = vmatpush1.xpose.msra.mxu0 0.0
    %319 = vmatprep.mubr.f32.mxu0 0.0
    %v320 = vand.u32 %v168, 4294901760
    %v321 = vsub.f32 %v168, %v320
    %v322 = vand.u32 %v321, 4294901760
    %v323 = vsub.f32 %v321, %v322
    %v324 = vand.u32 %v323, 4294901760
    %325 = vmatmul.mubr.f32.gmra.mrb[0].mxu0 %v324
    %v326 = vpop.f32.mrb[0].mxu0
    %v327 = vadd.f32 %v129, %v326
    %v328 = vpop.f32.mrb[0].mxu0
    %329 = vmatprep.mubr.f32.mxu0 0.0
    %v330 = vand.u32 %v171, 4294901760
    %v331 = vsub.f32 %v171, %v330
    %v332 = vand.u32 %v331, 4294901760
    %v333 = vsub.f32 %v331, %v332
    %v334 = vand.u32 %v333, 4294901760
    %335 = vmatmul.mubr.f32.gmra.mrb[0].mxu0 %v334
    %v336 = vpop.f32.mrb[0].mxu0
    %v337 = vadd.f32 %v134, %v336
    %v338 = vpop.f32.mrb[0].mxu0
    %339 = vmatprep.mubr.f32.mxu0 0.0
    %v340 = vand.u32 %v174, 4294901760
    %v341 = vsub.f32 %v174, %v340
    %v342 = vand.u32 %v341, 4294901760
    %v343 = vsub.f32 %v341, %v342
    %v344 = vand.u32 %v343, 4294901760
    %345 = vmatmul.mubr.f32.gmra.mrb[0].mxu0 %v344
    %v346 = vpop.f32.mrb[0].mxu0
    %v347 = vadd.f32 %v139, %v346
    %v348 = vpop.f32.mrb[0].mxu0
    %349 = vmatprep.mubr.f32.mxu0 0.0
    %v350 = vand.u32 %v177, 4294901760
    %v351 = vsub.f32 %v177, %v350
    %v352 = vand.u32 %v351, 4294901760
    %v353 = vsub.f32 %v351, %v352
    %v354 = vand.u32 %v353, 4294901760
    %355 = vmatmul.mubr.f32.gmra.mrb[0].mxu0 %v354
    %v356 = vpop.f32.mrb[0].mxu0
    %v357 = vadd.f32 %v144, %v356
    %v358 = vpop.f32.mrb[0].mxu0
    %359 = vmatprep.mubr.f32.mxu0 0.0
    %v360 = vand.u32 %v180, 4294901760
    %v361 = vsub.f32 %v180, %v360
    %v362 = vand.u32 %v361, 4294901760
    %v363 = vsub.f32 %v361, %v362
    %v364 = vand.u32 %v363, 4294901760
    %365 = vmatmul.mubr.f32.gmra.mrb[0].mxu0 %v364
    %v366 = vpop.f32.mrb[0].mxu0
    %v367 = vadd.f32 %v149, %v366
    %v368 = vpop.f32.mrb[0].mxu0
    %369 = vmatprep.mubr.f32.mxu0 0.0
    %v370 = vand.u32 %v183, 4294901760
    %v371 = vsub.f32 %v183, %v370
    %v372 = vand.u32 %v371, 4294901760
    %v373 = vsub.f32 %v371, %v372
    %v374 = vand.u32 %v373, 4294901760
    %375 = vmatmul.mubr.f32.gmra.mrb[0].mxu0 %v374
    %v376 = vpop.f32.mrb[0].mxu0
    %v377 = vadd.f32 %v154, %v376
    %v378 = vpop.f32.mrb[0].mxu0
    %379 = vmatprep.mubr.f32.mxu0 0.0
    %v380 = vand.u32 %v186, 4294901760
    %v381 = vsub.f32 %v186, %v380
    %v382 = vand.u32 %v381, 4294901760
    %v383 = vsub.f32 %v381, %v382
    %v384 = vand.u32 %v383, 4294901760
    %385 = vmatmul.mubr.f32.gmra.mrb[0].mxu0 %v384
    %v386 = vpop.f32.mrb[0].mxu0
    %v387 = vadd.f32 %v159, %v386
    %v388 = vpop.f32.mrb[0].mxu0
    %389 = vmatprep.mubr.f32.mxu0 0.0
    %v390 = vand.u32 %v189, 4294901760
    %v391 = vsub.f32 %v189, %v390
    %v392 = vand.u32 %v391, 4294901760
    %v393 = vsub.f32 %v391, %v392
    %v394 = vand.u32 %v393, 4294901760
    %395 = vmatmul.mubr.f32.gmra.mrb[0].mxu0 %v394
    %v396 = vpop.f32.mrb[0].mxu0
    %v397 = vadd.f32 %v164, %v396
    %v398 = vpop.f32.mrb[0].mxu0
    %399 = vdwg.mxu0
    %400 = vmatprep.subr.mxu0 0.0
    %v401 = vand.u32 %v192, 4294901760
    %v402 = vsub.f32 %v192, %v401
    %v403 = vand.u32 %v402, 4294901760
    %v404 = vsub.f32 %v402, %v403
    %v405 = vand.u32 %v404, 4294901760
    %406 = vmatpush1.xpose.msra.mxu0 %v405
    %407 = vmatprep.subr.mxu0 0.0
    %v408 = vand.u32 %v195, 4294901760
    %v409 = vsub.f32 %v195, %v408
    %v410 = vand.u32 %v409, 4294901760
    %v411 = vsub.f32 %v409, %v410
    %v412 = vand.u32 %v411, 4294901760
    %413 = vmatpush1.xpose.msra.mxu0 %v412
    %414 = vmatprep.subr.mxu0 0.0
    %v415 = vand.u32 %v198, 4294901760
    %v416 = vsub.f32 %v198, %v415
    %v417 = vand.u32 %v416, 4294901760
    %v418 = vsub.f32 %v416, %v417
    %v419 = vand.u32 %v418, 4294901760
    %420 = vmatpush1.xpose.msra.mxu0 %v419
    %421 = vmatprep.subr.mxu0 0.0
    %v422 = vand.u32 %v201, 4294901760
    %v423 = vsub.f32 %v201, %v422
    %v424 = vand.u32 %v423, 4294901760
    %v425 = vsub.f32 %v423, %v424
    %v426 = vand.u32 %v425, 4294901760
    %427 = vmatpush1.xpose.msra.mxu0 %v426
    %428 = vmatprep.subr.mxu0 0.0
    %v429 = vand.u32 %v204, 4294901760
    %v430 = vsub.f32 %v204, %v429
    %v431 = vand.u32 %v430, 4294901760
    %v432 = vsub.f32 %v430, %v431
    %v433 = vand.u32 %v432, 4294901760
    %434 = vmatpush1.xpose.msra.mxu0 %v433
    %435 = vmatprep.subr.mxu0 0.0
    %v436 = vand.u32 %v207, 4294901760
    %v437 = vsub.f32 %v207, %v436
    %v438 = vand.u32 %v437, 4294901760
    %v439 = vsub.f32 %v437, %v438
    %v440 = vand.u32 %v439, 4294901760
    %441 = vmatpush1.xpose.msra.mxu0 %v440
    %442 = vmatprep.subr.mxu0 0.0
    %v443 = vand.u32 %v210, 4294901760
    %v444 = vsub.f32 %v210, %v443
    %v445 = vand.u32 %v444, 4294901760
    %v446 = vsub.f32 %v444, %v445
    %v447 = vand.u32 %v446, 4294901760
    %448 = vmatpush1.xpose.msra.mxu0 %v447
    %449 = vmatprep.subr.mxu0 0.0
    %v450 = vand.u32 %v213, 4294901760
    %v451 = vsub.f32 %v213, %v450
    %v452 = vand.u32 %v451, 4294901760
    %v453 = vsub.f32 %v451, %v452
    %v454 = vand.u32 %v453, 4294901760
    %455 = vmatpush1.xpose.msra.mxu0 %v454
    %456 = vmatprep.subr.mxu0 0.0
    %v457 = vand.u32 %v216, 4294901760
    %v458 = vsub.f32 %v216, %v457
    %v459 = vand.u32 %v458, 4294901760
    %v460 = vsub.f32 %v458, %v459
    %v461 = vand.u32 %v460, 4294901760
    %462 = vmatpush1.xpose.msra.mxu0 %v461
    %463 = vmatprep.subr.mxu0 0.0
    %v464 = vand.u32 %v219, 4294901760
    %v465 = vsub.f32 %v219, %v464
    %v466 = vand.u32 %v465, 4294901760
    %v467 = vsub.f32 %v465, %v466
    %v468 = vand.u32 %v467, 4294901760
    %469 = vmatpush1.xpose.msra.mxu0 %v468
    %470 = vmatprep.subr.mxu0 0.0
    %v471 = vand.u32 %v222, 4294901760
    %v472 = vsub.f32 %v222, %v471
    %v473 = vand.u32 %v472, 4294901760
    %v474 = vsub.f32 %v472, %v473
    %v475 = vand.u32 %v474, 4294901760
    %476 = vmatpush1.xpose.msra.mxu0 %v475
    %477 = vmatprep.subr.mxu0 0.0
    %v478 = vand.u32 %v225, 4294901760
    %v479 = vsub.f32 %v225, %v478
    %v480 = vand.u32 %v479, 4294901760
    %v481 = vsub.f32 %v479, %v480
    %v482 = vand.u32 %v481, 4294901760
    %483 = vmatpush1.xpose.msra.mxu0 %v482
    %484 = vmatprep.subr.mxu0 0.0
    %v485 = vand.u32 %v228, 4294901760
    %v486 = vsub.f32 %v228, %v485
    %v487 = vand.u32 %v486, 4294901760
    %v488 = vsub.f32 %v486, %v487
    %v489 = vand.u32 %v488, 4294901760
    %490 = vmatpush1.xpose.msra.mxu0 %v489
    %491 = vmatprep.subr.mxu0 0.0
    %v492 = vand.u32 %v231, 4294901760
    %v493 = vsub.f32 %v231, %v492
    %v494 = vand.u32 %v493, 4294901760
    %v495 = vsub.f32 %v493, %v494
    %v496 = vand.u32 %v495, 4294901760
    %497 = vmatpush1.xpose.msra.mxu0 %v496
    %498 = vmatprep.subr.mxu0 0.0
    %v499 = vand.u32 %v234, 4294901760
    %v500 = vsub.f32 %v234, %v499
    %v501 = vand.u32 %v500, 4294901760
    %v502 = vsub.f32 %v500, %v501
    %v503 = vand.u32 %v502, 4294901760
    %504 = vmatpush1.xpose.msra.mxu0 %v503
    %505 = vmatprep.subr.mxu0 0.0
    %v506 = vand.u32 %v237, 4294901760
    %v507 = vsub.f32 %v237, %v506
    %v508 = vand.u32 %v507, 4294901760
    %v509 = vsub.f32 %v507, %v508
    %v510 = vand.u32 %v509, 4294901760
    %511 = vmatpush1.xpose.msra.mxu0 %v510
    %512 = vmatprep.subr.mxu0 0.0
    %513 = vmatpush1.xpose.msra.mxu0 0.0
    %514 = vmatprep.subr.mxu0 0.0
    %515 = vmatpush1.xpose.msra.mxu0 0.0
    %516 = vmatprep.subr.mxu0 0.0
    %517 = vmatpush1.xpose.msra.mxu0 0.0
    %518 = vmatprep.subr.mxu0 0.0
    %519 = vmatpush1.xpose.msra.mxu0 0.0
    %520 = vmatprep.subr.mxu0 0.0
    %521 = vmatpush1.xpose.msra.mxu0 0.0
    %522 = vmatprep.subr.mxu0 0.0
    %523 = vmatpush1.xpose.msra.mxu0 0.0
    %524 = vmatprep.subr.mxu0 0.0
    %525 = vmatpush1.xpose.msra.mxu0 0.0
    %526 = vmatprep.subr.mxu0 0.0
    %527 = vmatpush1.xpose.msra.mxu0 0.0
    %528 = vmatprep.subr.mxu0 0.0
    %529 = vmatpush1.xpose.msra.mxu0 0.0
    %530 = vmatprep.subr.mxu0 0.0
    %531 = vmatpush1.xpose.msra.mxu0 0.0
    %532 = vmatprep.subr.mxu0 0.0
    %533 = vmatpush1.xpose.msra.mxu0 0.0
    %534 = vmatprep.subr.mxu0 0.0
    %535 = vmatpush1.xpose.msra.mxu0 0.0
    %536 = vmatprep.subr.mxu0 0.0
    %537 = vmatpush1.xpose.msra.mxu0 0.0
    %538 = vmatprep.subr.mxu0 0.0
    %539 = vmatpush1.xpose.msra.mxu0 0.0
    %540 = vmatprep.subr.mxu0 0.0
    %541 = vmatpush1.xpose.msra.mxu0 0.0
    %542 = vmatprep.subr.mxu0 0.0
    %543 = vmatpush1.xpose.msra.mxu0 0.0
    %544 = vmatprep.mubr.f32.mxu0 0.0
    %v545 = vand.u32 %v168, 4294901760
    %546 = vmatmul.mubr.f32.gmra.mrb[0].mxu0 %v545
    %v547 = vpop.f32.mrb[0].mxu0
    %v548 = vadd.f32 %v327, %v547
    %v549 = vpop.f32.mrb[0].mxu0
    %550 = vmatprep.mubr.f32.mxu0 0.0
    %v551 = vand.u32 %v171, 4294901760
    %552 = vmatmul.mubr.f32.gmra.mrb[0].mxu0 %v551
    %v553 = vpop.f32.mrb[0].mxu0
    %v554 = vadd.f32 %v337, %v553
    %v555 = vpop.f32.mrb[0].mxu0
    %556 = vmatprep.mubr.f32.mxu0 0.0
    %v557 = vand.u32 %v174, 4294901760
    %558 = vmatmul.mubr.f32.gmra.mrb[0].mxu0 %v557
    %v559 = vpop.f32.mrb[0].mxu0
    %v560 = vadd.f32 %v347, %v559
    %v561 = vpop.f32.mrb[0].mxu0
    %562 = vmatprep.mubr.f32.mxu0 0.0
    %v563 = vand.u32 %v177, 4294901760
    %564 = vmatmul.mubr.f32.gmra.mrb[0].mxu0 %v563
    %v565 = vpop.f32.mrb[0].mxu0
    %v566 = vadd.f32 %v357, %v565
    %v567 = vpop.f32.mrb[0].mxu0
    %568 = vmatprep.mubr.f32.mxu0 0.0
    %v569 = vand.u32 %v180, 4294901760
    %570 = vmatmul.mubr.f32.gmra.mrb[0].mxu0 %v569
    %v571 = vpop.f32.mrb[0].mxu0
    %v572 = vadd.f32 %v367, %v571
    %v573 = vpop.f32.mrb[0].mxu0
    %574 = vmatprep.mubr.f32.mxu0 0.0
    %v575 = vand.u32 %v183, 4294901760
    %576 = vmatmul.mubr.f32.gmra.mrb[0].mxu0 %v575
    %v577 = vpop.f32.mrb[0].mxu0
    %v578 = vadd.f32 %v377, %v577
    %v579 = vpop.f32.mrb[0].mxu0
    %580 = vmatprep.mubr.f32.mxu0 0.0
    %v581 = vand.u32 %v186, 4294901760
    %582 = vmatmul.mubr.f32.gmra.mrb[0].mxu0 %v581
    %v583 = vpop.f32.mrb[0].mxu0
    %v584 = vadd.f32 %v387, %v583
    %v585 = vpop.f32.mrb[0].mxu0
    %586 = vmatprep.mubr.f32.mxu0 0.0
    %v587 = vand.u32 %v189, 4294901760
    %588 = vmatmul.mubr.f32.gmra.mrb[0].mxu0 %v587
    %v589 = vpop.f32.mrb[0].mxu0
    %v590 = vadd.f32 %v397, %v589
    %v591 = vpop.f32.mrb[0].mxu0
    %592 = vdwg.mxu0
    %593 = vmatprep.subr.mxu0 0.0
    %v594 = vand.u32 %v192, 4294901760
    %v595 = vsub.f32 %v192, %v594
    %596 = vmatpush1.xpose.msra.mxu0 %v595
    %597 = vmatprep.subr.mxu0 0.0
    %v598 = vand.u32 %v195, 4294901760
    %v599 = vsub.f32 %v195, %v598
    %600 = vmatpush1.xpose.msra.mxu0 %v599
    %601 = vmatprep.subr.mxu0 0.0
    %v602 = vand.u32 %v198, 4294901760
    %v603 = vsub.f32 %v198, %v602
    %604 = vmatpush1.xpose.msra.mxu0 %v603
    %605 = vmatprep.subr.mxu0 0.0
    %v606 = vand.u32 %v201, 4294901760
    %v607 = vsub.f32 %v201, %v606
    %608 = vmatpush1.xpose.msra.mxu0 %v607
    %609 = vmatprep.subr.mxu0 0.0
    %v610 = vand.u32 %v204, 4294901760
    %v611 = vsub.f32 %v204, %v610
    %612 = vmatpush1.xpose.msra.mxu0 %v611
    %613 = vmatprep.subr.mxu0 0.0
    %v614 = vand.u32 %v207, 4294901760
    %v615 = vsub.f32 %v207, %v614
    %616 = vmatpush1.xpose.msra.mxu0 %v615
    %617 = vmatprep.subr.mxu0 0.0
    %v618 = vand.u32 %v210, 4294901760
    %v619 = vsub.f32 %v210, %v618
    %620 = vmatpush1.xpose.msra.mxu0 %v619
    %621 = vmatprep.subr.mxu0 0.0
    %v622 = vand.u32 %v213, 4294901760
    %v623 = vsub.f32 %v213, %v622
    %624 = vmatpush1.xpose.msra.mxu0 %v623
    %625 = vmatprep.subr.mxu0 0.0
    %v626 = vand.u32 %v216, 4294901760
    %v627 = vsub.f32 %v216, %v626
    %628 = vmatpush1.xpose.msra.mxu0 %v627
    %629 = vmatprep.subr.mxu0 0.0
    %v630 = vand.u32 %v219, 4294901760
    %v631 = vsub.f32 %v219, %v630
    %632 = vmatpush1.xpose.msra.mxu0 %v631
    %633 = vmatprep.subr.mxu0 0.0
    %v634 = vand.u32 %v222, 4294901760
    %v635 = vsub.f32 %v222, %v634
    %636 = vmatpush1.xpose.msra.mxu0 %v635
    %637 = vmatprep.subr.mxu0 0.0
    %v638 = vand.u32 %v225, 4294901760
    %v639 = vsub.f32 %v225, %v638
    %640 = vmatpush1.xpose.msra.mxu0 %v639
    %641 = vmatprep.subr.mxu0 0.0
    %v642 = vand.u32 %v228, 4294901760
    %v643 = vsub.f32 %v228, %v642
    %644 = vmatpush1.xpose.msra.mxu0 %v643
    %645 = vmatprep.subr.mxu0 0.0
    %v646 = vand.u32 %v231, 4294901760
    %v647 = vsub.f32 %v231, %v646
    %648 = vmatpush1.xpose.msra.mxu0 %v647
    %649 = vmatprep.subr.mxu0 0.0
    %v650 = vand.u32 %v234, 4294901760
    %v651 = vsub.f32 %v234, %v650
    %652 = vmatpush1.xpose.msra.mxu0 %v651
    %653 = vmatprep.subr.mxu0 0.0
    %v654 = vand.u32 %v237, 4294901760
    %v655 = vsub.f32 %v237, %v654
    %656 = vmatpush1.xpose.msra.mxu0 %v655
    %657 = vmatprep.subr.mxu0 0.0
    %658 = vmatpush1.xpose.msra.mxu0 0.0
    %659 = vmatprep.subr.mxu0 0.0
    %660 = vmatpush1.xpose.msra.mxu0 0.0
    %661 = vmatprep.subr.mxu0 0.0
    %662 = vmatpush1.xpose.msra.mxu0 0.0
    %663 = vmatprep.subr.mxu0 0.0
    %664 = vmatpush1.xpose.msra.mxu0 0.0
    %665 = vmatprep.subr.mxu0 0.0
    %666 = vmatpush1.xpose.msra.mxu0 0.0
    %667 = vmatprep.subr.mxu0 0.0
    %668 = vmatpush1.xpose.msra.mxu0 0.0
    %669 = vmatprep.subr.mxu0 0.0
    %670 = vmatpush1.xpose.msra.mxu0 0.0
    %671 = vmatprep.subr.mxu0 0.0
    %672 = vmatpush1.xpose.msra.mxu0 0.0
    %673 = vmatprep.subr.mxu0 0.0
    %674 = vmatpush1.xpose.msra.mxu0 0.0
    %675 = vmatprep.subr.mxu0 0.0
    %676 = vmatpush1.xpose.msra.mxu0 0.0
    %677 = vmatprep.subr.mxu0 0.0
    %678 = vmatpush1.xpose.msra.mxu0 0.0
    %679 = vmatprep.subr.mxu0 0.0
    %680 = vmatpush1.xpose.msra.mxu0 0.0
    %681 = vmatprep.subr.mxu0 0.0
    %682 = vmatpush1.xpose.msra.mxu0 0.0
    %683 = vmatprep.subr.mxu0 0.0
    %684 = vmatpush1.xpose.msra.mxu0 0.0
    %685 = vmatprep.subr.mxu0 0.0
    %686 = vmatpush1.xpose.msra.mxu0 0.0
    %687 = vmatprep.subr.mxu0 0.0
    %688 = vmatpush1.xpose.msra.mxu0 0.0
    %689 = vmatprep.mubr.f32.mxu0 0.0
    %v690 = vand.u32 %v168, 4294901760
    %v691 = vsub.f32 %v168, %v690
    %692 = vmatmul.mubr.f32.gmra.mrb[0].mxu0 %v691
    %v693 = vpop.f32.mrb[0].mxu0
    %v694 = vadd.f32 %v548, %v693
    %v695 = vpop.f32.mrb[0].mxu0
    %696 = vmatprep.mubr.f32.mxu0 0.0
    %v697 = vand.u32 %v171, 4294901760
    %v698 = vsub.f32 %v171, %v697
    %699 = vmatmul.mubr.f32.gmra.mrb[0].mxu0 %v698
    %v700 = vpop.f32.mrb[0].mxu0
    %v701 = vadd.f32 %v554, %v700
    %v702 = vpop.f32.mrb[0].mxu0
    %703 = vmatprep.mubr.f32.mxu0 0.0
    %v704 = vand.u32 %v174, 4294901760
    %v705 = vsub.f32 %v174, %v704
    %706 = vmatmul.mubr.f32.gmra.mrb[0].mxu0 %v705
    %v707 = vpop.f32.mrb[0].mxu0
    %v708 = vadd.f32 %v560, %v707
    %v709 = vpop.f32.mrb[0].mxu0
    %710 = vmatprep.mubr.f32.mxu0 0.0
    %v711 = vand.u32 %v177, 4294901760
    %v712 = vsub.f32 %v177, %v711
    %713 = vmatmul.mubr.f32.gmra.mrb[0].mxu0 %v712
    %v714 = vpop.f32.mrb[0].mxu0
    %v715 = vadd.f32 %v566, %v714
    %v716 = vpop.f32.mrb[0].mxu0
    %717 = vmatprep.mubr.f32.mxu0 0.0
    %v718 = vand.u32 %v180, 4294901760
    %v719 = vsub.f32 %v180, %v718
    %720 = vmatmul.mubr.f32.gmra.mrb[0].mxu0 %v719
    %v721 = vpop.f32.mrb[0].mxu0
    %v722 = vadd.f32 %v572, %v721
    %v723 = vpop.f32.mrb[0].mxu0
    %724 = vmatprep.mubr.f32.mxu0 0.0
    %v725 = vand.u32 %v183, 4294901760
    %v726 = vsub.f32 %v183, %v725
    %727 = vmatmul.mubr.f32.gmra.mrb[0].mxu0 %v726
    %v728 = vpop.f32.mrb[0].mxu0
    %v729 = vadd.f32 %v578, %v728
    %v730 = vpop.f32.mrb[0].mxu0
    %731 = vmatprep.mubr.f32.mxu0 0.0
    %v732 = vand.u32 %v186, 4294901760
    %v733 = vsub.f32 %v186, %v732
    %734 = vmatmul.mubr.f32.gmra.mrb[0].mxu0 %v733
    %v735 = vpop.f32.mrb[0].mxu0
    %v736 = vadd.f32 %v584, %v735
    %v737 = vpop.f32.mrb[0].mxu0
    %738 = vmatprep.mubr.f32.mxu0 0.0
    %v739 = vand.u32 %v189, 4294901760
    %v740 = vsub.f32 %v189, %v739
    %741 = vmatmul.mubr.f32.gmra.mrb[0].mxu0 %v740
    %v742 = vpop.f32.mrb[0].mxu0
    %v743 = vadd.f32 %v590, %v742
    %v744 = vpop.f32.mrb[0].mxu0
    %745 = vdwg.mxu0
    %746 = vmatprep.subr.mxu0 0.0
    %v747 = vand.u32 %v192, 4294901760
    %748 = vmatpush1.xpose.msra.mxu0 %v747
    %749 = vmatprep.subr.mxu0 0.0
    %v750 = vand.u32 %v195, 4294901760
    %751 = vmatpush1.xpose.msra.mxu0 %v750
    %752 = vmatprep.subr.mxu0 0.0
    %v753 = vand.u32 %v198, 4294901760
    %754 = vmatpush1.xpose.msra.mxu0 %v753
    %755 = vmatprep.subr.mxu0 0.0
    %v756 = vand.u32 %v201, 4294901760
    %757 = vmatpush1.xpose.msra.mxu0 %v756
    %758 = vmatprep.subr.mxu0 0.0
    %v759 = vand.u32 %v204, 4294901760
    %760 = vmatpush1.xpose.msra.mxu0 %v759
    %761 = vmatprep.subr.mxu0 0.0
    %v762 = vand.u32 %v207, 4294901760
    %763 = vmatpush1.xpose.msra.mxu0 %v762
    %764 = vmatprep.subr.mxu0 0.0
    %v765 = vand.u32 %v210, 4294901760
    %766 = vmatpush1.xpose.msra.mxu0 %v765
    %767 = vmatprep.subr.mxu0 0.0
    %v768 = vand.u32 %v213, 4294901760
    %769 = vmatpush1.xpose.msra.mxu0 %v768
    %770 = vmatprep.subr.mxu0 0.0
    %v771 = vand.u32 %v216, 4294901760
    %772 = vmatpush1.xpose.msra.mxu0 %v771
    %773 = vmatprep.subr.mxu0 0.0
    %v774 = vand.u32 %v219, 4294901760
    %775 = vmatpush1.xpose.msra.mxu0 %v774
    %776 = vmatprep.subr.mxu0 0.0
    %v777 = vand.u32 %v222, 4294901760
    %778 = vmatpush1.xpose.msra.mxu0 %v777
    %779 = vmatprep.subr.mxu0 0.0
    %v780 = vand.u32 %v225, 4294901760
    %781 = vmatpush1.xpose.msra.mxu0 %v780
    %782 = vmatprep.subr.mxu0 0.0
    %v783 = vand.u32 %v228, 4294901760
    %784 = vmatpush1.xpose.msra.mxu0 %v783
    %785 = vmatprep.subr.mxu0 0.0
    %v786 = vand.u32 %v231, 4294901760
    %787 = vmatpush1.xpose.msra.mxu0 %v786
    %788 = vmatprep.subr.mxu0 0.0
    %v789 = vand.u32 %v234, 4294901760
    %790 = vmatpush1.xpose.msra.mxu0 %v789
    %791 = vmatprep.subr.mxu0 0.0
    %v792 = vand.u32 %v237, 4294901760
    %793 = vmatpush1.xpose.msra.mxu0 %v792
    %794 = vmatprep.subr.mxu0 0.0
    %795 = vmatpush1.xpose.msra.mxu0 0.0
    %796 = vmatprep.subr.mxu0 0.0
    %797 = vmatpush1.xpose.msra.mxu0 0.0
    %798 = vmatprep.subr.mxu0 0.0
    %799 = vmatpush1.xpose.msra.mxu0 0.0
    %800 = vmatprep.subr.mxu0 0.0
    %801 = vmatpush1.xpose.msra.mxu0 0.0
    %802 = vmatprep.subr.mxu0 0.0
    %803 = vmatpush1.xpose.msra.mxu0 0.0
    %804 = vmatprep.subr.mxu0 0.0
    %805 = vmatpush1.xpose.msra.mxu0 0.0
    %806 = vmatprep.subr.mxu0 0.0
    %807 = vmatpush1.xpose.msra.mxu0 0.0
    %808 = vmatprep.subr.mxu0 0.0
    %809 = vmatpush1.xpose.msra.mxu0 0.0
    %810 = vmatprep.subr.mxu0 0.0
    %811 = vmatpush1.xpose.msra.mxu0 0.0
    %812 = vmatprep.subr.mxu0 0.0
    %813 = vmatpush1.xpose.msra.mxu0 0.0
    %814 = vmatprep.subr.mxu0 0.0
    %815 = vmatpush1.xpose.msra.mxu0 0.0
    %816 = vmatprep.subr.mxu0 0.0
    %817 = vmatpush1.xpose.msra.mxu0 0.0
    %818 = vmatprep.subr.mxu0 0.0
    %819 = vmatpush1.xpose.msra.mxu0 0.0
    %820 = vmatprep.subr.mxu0 0.0
    %821 = vmatpush1.xpose.msra.mxu0 0.0
    %822 = vmatprep.subr.mxu0 0.0
    %823 = vmatpush1.xpose.msra.mxu0 0.0
    %824 = vmatprep.subr.mxu0 0.0
    %825 = vmatpush1.xpose.msra.mxu0 0.0
    %826 = vmatprep.mubr.f32.mxu0 0.0
    %v827 = vand.u32 %v168, 4294901760
    %v828 = vsub.f32 %v168, %v827
    %v829 = vand.u32 %v828, 4294901760
    %830 = vmatmul.mubr.f32.gmra.mrb[0].mxu0 %v829
    %v831 = vpop.f32.mrb[0].mxu0
    %v832 = vadd.f32 %v694, %v831
    %v833 = vpop.f32.mrb[0].mxu0
    %834 = vmatprep.mubr.f32.mxu0 0.0
    %v835 = vand.u32 %v171, 4294901760
    %v836 = vsub.f32 %v171, %v835
    %v837 = vand.u32 %v836, 4294901760
    %838 = vmatmul.mubr.f32.gmra.mrb[0].mxu0 %v837
    %v839 = vpop.f32.mrb[0].mxu0
    %v840 = vadd.f32 %v701, %v839
    %v841 = vpop.f32.mrb[0].mxu0
    %842 = vmatprep.mubr.f32.mxu0 0.0
    %v843 = vand.u32 %v174, 4294901760
    %v844 = vsub.f32 %v174, %v843
    %v845 = vand.u32 %v844, 4294901760
    %846 = vmatmul.mubr.f32.gmra.mrb[0].mxu0 %v845
    %v847 = vpop.f32.mrb[0].mxu0
    %v848 = vadd.f32 %v708, %v847
    %v849 = vpop.f32.mrb[0].mxu0
    %850 = vmatprep.mubr.f32.mxu0 0.0
    %v851 = vand.u32 %v177, 4294901760
    %v852 = vsub.f32 %v177, %v851
    %v853 = vand.u32 %v852, 4294901760
    %854 = vmatmul.mubr.f32.gmra.mrb[0].mxu0 %v853
    %v855 = vpop.f32.mrb[0].mxu0
    %v856 = vadd.f32 %v715, %v855
    %v857 = vpop.f32.mrb[0].mxu0
    %858 = vmatprep.mubr.f32.mxu0 0.0
    %v859 = vand.u32 %v180, 4294901760
    %v860 = vsub.f32 %v180, %v859
    %v861 = vand.u32 %v860, 4294901760
    %862 = vmatmul.mubr.f32.gmra.mrb[0].mxu0 %v861
    %v863 = vpop.f32.mrb[0].mxu0
    %v864 = vadd.f32 %v722, %v863
    %v865 = vpop.f32.mrb[0].mxu0
    %866 = vmatprep.mubr.f32.mxu0 0.0
    %v867 = vand.u32 %v183, 4294901760
    %v868 = vsub.f32 %v183, %v867
    %v869 = vand.u32 %v868, 4294901760
    %870 = vmatmul.mubr.f32.gmra.mrb[0].mxu0 %v869
    %v871 = vpop.f32.mrb[0].mxu0
    %v872 = vadd.f32 %v729, %v871
    %v873 = vpop.f32.mrb[0].mxu0
    %874 = vmatprep.mubr.f32.mxu0 0.0
    %v875 = vand.u32 %v186, 4294901760
    %v876 = vsub.f32 %v186, %v875
    %v877 = vand.u32 %v876, 4294901760
    %878 = vmatmul.mubr.f32.gmra.mrb[0].mxu0 %v877
    %v879 = vpop.f32.mrb[0].mxu0
    %v880 = vadd.f32 %v736, %v879
    %v881 = vpop.f32.mrb[0].mxu0
    %882 = vmatprep.mubr.f32.mxu0 0.0
    %v883 = vand.u32 %v189, 4294901760
    %v884 = vsub.f32 %v189, %v883
    %v885 = vand.u32 %v884, 4294901760
    %886 = vmatmul.mubr.f32.gmra.mrb[0].mxu0 %v885
    %v887 = vpop.f32.mrb[0].mxu0
    %v888 = vadd.f32 %v743, %v887
    %v889 = vpop.f32.mrb[0].mxu0
    %890 = vdwg.mxu0
    %891 = vmatprep.subr.mxu0 0.0
    %v892 = vand.u32 %v192, 4294901760
    %v893 = vsub.f32 %v192, %v892
    %v894 = vand.u32 %v893, 4294901760
    %895 = vmatpush1.xpose.msra.mxu0 %v894
    %896 = vmatprep.subr.mxu0 0.0
    %v897 = vand.u32 %v195, 4294901760
    %v898 = vsub.f32 %v195, %v897
    %v899 = vand.u32 %v898, 4294901760
    %900 = vmatpush1.xpose.msra.mxu0 %v899
    %901 = vmatprep.subr.mxu0 0.0
    %v902 = vand.u32 %v198, 4294901760
    %v903 = vsub.f32 %v198, %v902
    %v904 = vand.u32 %v903, 4294901760
    %905 = vmatpush1.xpose.msra.mxu0 %v904
    %906 = vmatprep.subr.mxu0 0.0
    %v907 = vand.u32 %v201, 4294901760
    %v908 = vsub.f32 %v201, %v907
    %v909 = vand.u32 %v908, 4294901760
    %910 = vmatpush1.xpose.msra.mxu0 %v909
    %911 = vmatprep.subr.mxu0 0.0
    %v912 = vand.u32 %v204, 4294901760
    %v913 = vsub.f32 %v204, %v912
    %v914 = vand.u32 %v913, 4294901760
    %915 = vmatpush1.xpose.msra.mxu0 %v914
    %916 = vmatprep.subr.mxu0 0.0
    %v917 = vand.u32 %v207, 4294901760
    %v918 = vsub.f32 %v207, %v917
    %v919 = vand.u32 %v918, 4294901760
    %920 = vmatpush1.xpose.msra.mxu0 %v919
    %921 = vmatprep.subr.mxu0 0.0
    %v922 = vand.u32 %v210, 4294901760
    %v923 = vsub.f32 %v210, %v922
    %v924 = vand.u32 %v923, 4294901760
    %925 = vmatpush1.xpose.msra.mxu0 %v924
    %926 = vmatprep.subr.mxu0 0.0
    %v927 = vand.u32 %v213, 4294901760
    %v928 = vsub.f32 %v213, %v927
    %v929 = vand.u32 %v928, 4294901760
    %930 = vmatpush1.xpose.msra.mxu0 %v929
    %931 = vmatprep.subr.mxu0 0.0
    %v932 = vand.u32 %v216, 4294901760
    %v933 = vsub.f32 %v216, %v932
    %v934 = vand.u32 %v933, 4294901760
    %935 = vmatpush1.xpose.msra.mxu0 %v934
    %936 = vmatprep.subr.mxu0 0.0
    %v937 = vand.u32 %v219, 4294901760
    %v938 = vsub.f32 %v219, %v937
    %v939 = vand.u32 %v938, 4294901760
    %940 = vmatpush1.xpose.msra.mxu0 %v939
    %941 = vmatprep.subr.mxu0 0.0
    %v942 = vand.u32 %v222, 4294901760
    %v943 = vsub.f32 %v222, %v942
    %v944 = vand.u32 %v943, 4294901760
    %945 = vmatpush1.xpose.msra.mxu0 %v944
    %946 = vmatprep.subr.mxu0 0.0
    %v947 = vand.u32 %v225, 4294901760
    %v948 = vsub.f32 %v225, %v947
    %v949 = vand.u32 %v948, 4294901760
    %950 = vmatpush1.xpose.msra.mxu0 %v949
    %951 = vmatprep.subr.mxu0 0.0
    %v952 = vand.u32 %v228, 4294901760
    %v953 = vsub.f32 %v228, %v952
    %v954 = vand.u32 %v953, 4294901760
    %955 = vmatpush1.xpose.msra.mxu0 %v954
    %956 = vmatprep.subr.mxu0 0.0
    %v957 = vand.u32 %v231, 4294901760
    %v958 = vsub.f32 %v231, %v957
    %v959 = vand.u32 %v958, 4294901760
    %960 = vmatpush1.xpose.msra.mxu0 %v959
    %961 = vmatprep.subr.mxu0 0.0
    %v962 = vand.u32 %v234, 4294901760
    %v963 = vsub.f32 %v234, %v962
    %v964 = vand.u32 %v963, 4294901760
    %965 = vmatpush1.xpose.msra.mxu0 %v964
    %966 = vmatprep.subr.mxu0 0.0
    %v967 = vand.u32 %v237, 4294901760
    %v968 = vsub.f32 %v237, %v967
    %v969 = vand.u32 %v968, 4294901760
    %970 = vmatpush1.xpose.msra.mxu0 %v969
    %971 = vmatprep.subr.mxu0 0.0
    %972 = vmatpush1.xpose.msra.mxu0 0.0
    %973 = vmatprep.subr.mxu0 0.0
    %974 = vmatpush1.xpose.msra.mxu0 0.0
    %975 = vmatprep.subr.mxu0 0.0
    %976 = vmatpush1.xpose.msra.mxu0 0.0
    %977 = vmatprep.subr.mxu0 0.0
    %978 = vmatpush1.xpose.msra.mxu0 0.0
    %979 = vmatprep.subr.mxu0 0.0
    %980 = vmatpush1.xpose.msra.mxu0 0.0
    %981 = vmatprep.subr.mxu0 0.0
    %982 = vmatpush1.xpose.msra.mxu0 0.0
    %983 = vmatprep.subr.mxu0 0.0
    %984 = vmatpush1.xpose.msra.mxu0 0.0
    %985 = vmatprep.subr.mxu0 0.0
    %986 = vmatpush1.xpose.msra.mxu0 0.0
    %987 = vmatprep.subr.mxu0 0.0
    %988 = vmatpush1.xpose.msra.mxu0 0.0
    %989 = vmatprep.subr.mxu0 0.0
    %990 = vmatpush1.xpose.msra.mxu0 0.0
    %991 = vmatprep.subr.mxu0 0.0
    %992 = vmatpush1.xpose.msra.mxu0 0.0
    %993 = vmatprep.subr.mxu0 0.0
    %994 = vmatpush1.xpose.msra.mxu0 0.0
    %995 = vmatprep.subr.mxu0 0.0
    %996 = vmatpush1.xpose.msra.mxu0 0.0
    %997 = vmatprep.subr.mxu0 0.0
    %998 = vmatpush1.xpose.msra.mxu0 0.0
    %999 = vmatprep.subr.mxu0 0.0
    %1000 = vmatpush1.xpose.msra.mxu0 0.0
    %1001 = vmatprep.subr.mxu0 0.0
    %1002 = vmatpush1.xpose.msra.mxu0 0.0
    %1003 = vmatprep.mubr.f32.mxu0 0.0
    %v1004 = vand.u32 %v168, 4294901760
    %1005 = vmatmul.mubr.f32.gmra.mrb[0].mxu0 %v1004
    %v1006 = vpop.f32.mrb[0].mxu0
    %v1007 = vadd.f32 %v832, %v1006
    %v1008 = vpop.f32.mrb[0].mxu0
    %1009 = vmatprep.mubr.f32.mxu0 0.0
    %v1010 = vand.u32 %v171, 4294901760
    %1011 = vmatmul.mubr.f32.gmra.mrb[0].mxu0 %v1010
    %v1012 = vpop.f32.mrb[0].mxu0
    %v1013 = vadd.f32 %v840, %v1012
    %v1014 = vpop.f32.mrb[0].mxu0
    %1015 = vmatprep.mubr.f32.mxu0 0.0
    %v1016 = vand.u32 %v174, 4294901760
    %1017 = vmatmul.mubr.f32.gmra.mrb[0].mxu0 %v1016
    %v1018 = vpop.f32.mrb[0].mxu0
    %v1019 = vadd.f32 %v848, %v1018
    %v1020 = vpop.f32.mrb[0].mxu0
    %1021 = vmatprep.mubr.f32.mxu0 0.0
    %v1022 = vand.u32 %v177, 4294901760
    %1023 = vmatmul.mubr.f32.gmra.mrb[0].mxu0 %v1022
    %v1024 = vpop.f32.mrb[0].mxu0
    %v1025 = vadd.f32 %v856, %v1024
    %v1026 = vpop.f32.mrb[0].mxu0
    %1027 = vmatprep.mubr.f32.mxu0 0.0
    %v1028 = vand.u32 %v180, 4294901760
    %1029 = vmatmul.mubr.f32.gmra.mrb[0].mxu0 %v1028
    %v1030 = vpop.f32.mrb[0].mxu0
    %v1031 = vadd.f32 %v864, %v1030
    %v1032 = vpop.f32.mrb[0].mxu0
    %1033 = vmatprep.mubr.f32.mxu0 0.0
    %v1034 = vand.u32 %v183, 4294901760
    %1035 = vmatmul.mubr.f32.gmra.mrb[0].mxu0 %v1034
    %v1036 = vpop.f32.mrb[0].mxu0
    %v1037 = vadd.f32 %v872, %v1036
    %v1038 = vpop.f32.mrb[0].mxu0
    %1039 = vmatprep.mubr.f32.mxu0 0.0
    %v1040 = vand.u32 %v186, 4294901760
    %1041 = vmatmul.mubr.f32.gmra.mrb[0].mxu0 %v1040
    %v1042 = vpop.f32.mrb[0].mxu0
    %v1043 = vadd.f32 %v880, %v1042
    %v1044 = vpop.f32.mrb[0].mxu0
    %1045 = vmatprep.mubr.f32.mxu0 0.0
    %v1046 = vand.u32 %v189, 4294901760
    %1047 = vmatmul.mubr.f32.gmra.mrb[0].mxu0 %v1046
    %v1048 = vpop.f32.mrb[0].mxu0
    %v1049 = vadd.f32 %v888, %v1048
    %v1050 = vpop.f32.mrb[0].mxu0
    %1051 = vdwg.mxu0
    %1052 = vmatprep.subr.mxu0 0.0
    %v1053 = vand.u32 %v192, 4294901760
    %1054 = vmatpush1.xpose.msra.mxu0 %v1053
    %1055 = vmatprep.subr.mxu0 0.0
    %v1056 = vand.u32 %v195, 4294901760
    %1057 = vmatpush1.xpose.msra.mxu0 %v1056
    %1058 = vmatprep.subr.mxu0 0.0
    %v1059 = vand.u32 %v198, 4294901760
    %1060 = vmatpush1.xpose.msra.mxu0 %v1059
    %1061 = vmatprep.subr.mxu0 0.0
    %v1062 = vand.u32 %v201, 4294901760
    %1063 = vmatpush1.xpose.msra.mxu0 %v1062
    %1064 = vmatprep.subr.mxu0 0.0
    %v1065 = vand.u32 %v204, 4294901760
    %1066 = vmatpush1.xpose.msra.mxu0 %v1065
    %1067 = vmatprep.subr.mxu0 0.0
    %v1068 = vand.u32 %v207, 4294901760
    %1069 = vmatpush1.xpose.msra.mxu0 %v1068
    %1070 = vmatprep.subr.mxu0 0.0
    %v1071 = vand.u32 %v210, 4294901760
    %1072 = vmatpush1.xpose.msra.mxu0 %v1071
    %1073 = vmatprep.subr.mxu0 0.0
    %v1074 = vand.u32 %v213, 4294901760
    %1075 = vmatpush1.xpose.msra.mxu0 %v1074
    %1076 = vmatprep.subr.mxu0 0.0
    %v1077 = vand.u32 %v216, 4294901760
    %1078 = vmatpush1.xpose.msra.mxu0 %v1077
    %1079 = vmatprep.subr.mxu0 0.0
    %v1080 = vand.u32 %v219, 4294901760
    %1081 = vmatpush1.xpose.msra.mxu0 %v1080
    %1082 = vmatprep.subr.mxu0 0.0
    %v1083 = vand.u32 %v222, 4294901760
    %1084 = vmatpush1.xpose.msra.mxu0 %v1083
    %1085 = vmatprep.subr.mxu0 0.0
    %v1086 = vand.u32 %v225, 4294901760
    %1087 = vmatpush1.xpose.msra.mxu0 %v1086
    %1088 = vmatprep.subr.mxu0 0.0
    %v1089 = vand.u32 %v228, 4294901760
    %1090 = vmatpush1.xpose.msra.mxu0 %v1089
    %1091 = vmatprep.subr.mxu0 0.0
    %v1092 = vand.u32 %v231, 4294901760
    %1093 = vmatpush1.xpose.msra.mxu0 %v1092
    %1094 = vmatprep.subr.mxu0 0.0
    %v1095 = vand.u32 %v234, 4294901760
    %1096 = vmatpush1.xpose.msra.mxu0 %v1095
    %1097 = vmatprep.subr.mxu0 0.0
    %v1098 = vand.u32 %v237, 4294901760
    %1099 = vmatpush1.xpose.msra.mxu0 %v1098
    %1100 = vmatprep.subr.mxu0 0.0
    %1101 = vmatpush1.xpose.msra.mxu0 0.0
    %1102 = vmatprep.subr.mxu0 0.0
    %1103 = vmatpush1.xpose.msra.mxu0 0.0
    %1104 = vmatprep.subr.mxu0 0.0
    %1105 = vmatpush1.xpose.msra.mxu0 0.0
    %1106 = vmatprep.subr.mxu0 0.0
    %1107 = vmatpush1.xpose.msra.mxu0 0.0
    %1108 = vmatprep.subr.mxu0 0.0
    %1109 = vmatpush1.xpose.msra.mxu0 0.0
    %1110 = vmatprep.subr.mxu0 0.0
    %1111 = vmatpush1.xpose.msra.mxu0 0.0
    %1112 = vmatprep.subr.mxu0 0.0
    %1113 = vmatpush1.xpose.msra.mxu0 0.0
    %1114 = vmatprep.subr.mxu0 0.0
    %1115 = vmatpush1.xpose.msra.mxu0 0.0
    %1116 = vmatprep.subr.mxu0 0.0
    %1117 = vmatpush1.xpose.msra.mxu0 0.0
    %1118 = vmatprep.subr.mxu0 0.0
    %1119 = vmatpush1.xpose.msra.mxu0 0.0
    %1120 = vmatprep.subr.mxu0 0.0
    %1121 = vmatpush1.xpose.msra.mxu0 0.0
    %1122 = vmatprep.subr.mxu0 0.0
    %1123 = vmatpush1.xpose.msra.mxu0 0.0
    %1124 = vmatprep.subr.mxu0 0.0
    %1125 = vmatpush1.xpose.msra.mxu0 0.0
    %1126 = vmatprep.subr.mxu0 0.0
    %1127 = vmatpush1.xpose.msra.mxu0 0.0
    %1128 = vmatprep.subr.mxu0 0.0
    %1129 = vmatpush1.xpose.msra.mxu0 0.0
    %1130 = vmatprep.subr.mxu0 0.0
    %1131 = vmatpush1.xpose.msra.mxu0 0.0
    %1132 = vmatprep.mubr.f32.mxu0 0.0
    %v1133 = vand.u32 %v168, 4294901760
    %1134 = vmatmul.mubr.f32.gmra.mrb[0].mxu0 %v1133
    %v1135 = vpop.f32.mrb[0].mxu0
    %v1136 = vadd.f32 %v1007, %v1135
    %v1137 = vpop.f32.mrb[0].mxu0
    %1138 = vmatprep.mubr.f32.mxu0 0.0
    %v1139 = vand.u32 %v171, 4294901760
    %1140 = vmatmul.mubr.f32.gmra.mrb[0].mxu0 %v1139
    %v1141 = vpop.f32.mrb[0].mxu0
    %v1142 = vadd.f32 %v1013, %v1141
    %v1143 = vpop.f32.mrb[0].mxu0
    %1144 = vmatprep.mubr.f32.mxu0 0.0
    %v1145 = vand.u32 %v174, 4294901760
    %1146 = vmatmul.mubr.f32.gmra.mrb[0].mxu0 %v1145
    %v1147 = vpop.f32.mrb[0].mxu0
    %v1148 = vadd.f32 %v1019, %v1147
    %v1149 = vpop.f32.mrb[0].mxu0
    %1150 = vmatprep.mubr.f32.mxu0 0.0
    %v1151 = vand.u32 %v177, 4294901760
    %1152 = vmatmul.mubr.f32.gmra.mrb[0].mxu0 %v1151
    %v1153 = vpop.f32.mrb[0].mxu0
    %v1154 = vadd.f32 %v1025, %v1153
    %v1155 = vpop.f32.mrb[0].mxu0
    %1156 = vmatprep.mubr.f32.mxu0 0.0
    %v1157 = vand.u32 %v180, 4294901760
    %1158 = vmatmul.mubr.f32.gmra.mrb[0].mxu0 %v1157
    %v1159 = vpop.f32.mrb[0].mxu0
    %v1160 = vadd.f32 %v1031, %v1159
    %v1161 = vpop.f32.mrb[0].mxu0
    %1162 = vmatprep.mubr.f32.mxu0 0.0
    %v1163 = vand.u32 %v183, 4294901760
    %1164 = vmatmul.mubr.f32.gmra.mrb[0].mxu0 %v1163
    %v1165 = vpop.f32.mrb[0].mxu0
    %v1166 = vadd.f32 %v1037, %v1165
    %v1167 = vpop.f32.mrb[0].mxu0
    %1168 = vmatprep.mubr.f32.mxu0 0.0
    %v1169 = vand.u32 %v186, 4294901760
    %1170 = vmatmul.mubr.f32.gmra.mrb[0].mxu0 %v1169
    %v1171 = vpop.f32.mrb[0].mxu0
    %v1172 = vadd.f32 %v1043, %v1171
    %v1173 = vpop.f32.mrb[0].mxu0
    %1174 = vmatprep.mubr.f32.mxu0 0.0
    %v1175 = vand.u32 %v189, 4294901760
    %1176 = vmatmul.mubr.f32.gmra.mrb[0].mxu0 %v1175
    %v1177 = vpop.f32.mrb[0].mxu0
    %v1178 = vadd.f32 %v1049, %v1177
    %v1179 = vpop.f32.mrb[0].mxu0
    %1180 = vdwg.mxu0
    %v1181 = vmax.f32 %v1136, 0.0
    %v1182 = vmax.f32 %v1142, 0.0
    %v1183 = vmax.f32 %v1148, 0.0
    %v1184 = vmax.f32 %v1154, 0.0
    %v1185 = vmax.f32 %v1160, 0.0
    %v1186 = vmax.f32 %v1166, 0.0
    %v1187 = vmax.f32 %v1172, 0.0
    %v1188 = vmax.f32 %v1178, 0.0
    %v1189 = vld [vmem:[#allocation7] sm:$0xff]
    %v1190 = vld [vmem:[#allocation7 + $0x8] sm:$0xff]
    %v1191 = vld [vmem:[#allocation7 + $0x10] sm:$0xff]
    %v1192 = vld [vmem:[#allocation7 + $0x18] sm:$0xff]
    %1194 = vset.pattern.permute.xlu0 0
    %1195 = vperm.xlu0 %1194, %v113
    %v1196 = vpop.permute.xlu0 %1195
    %1199 = vset.pattern.permute.xlu0 0
    %1200 = vperm.xlu0 %1199, %v114
    %v1201 = vpop.permute.xlu0 %1200
    %1204 = vset.pattern.permute.xlu0 0
    %1205 = vperm.xlu0 %1204, %v115
    %v1206 = vpop.permute.xlu0 %1205
    %1209 = vset.pattern.permute.xlu0 0
    %1210 = vperm.xlu0 %1209, %v116
    %v1211 = vpop.permute.xlu0 %1210
    %vm1213 = vcmask 523264
    %v1215 = vsel %vm1213, %v1189, 0
    %v1218 = vsel %vm1213, %v1190, 0
    %v1221 = vsel %vm1213, %v1191, 0
    %v1224 = vsel %vm1213, %v1192, 0
    %1226 = vmatprep.subr.mxu0 0.0
    %v1227 = vand.u32 %v1181, 4294901760
    %1228 = vmatpush1.msra.mxu0 %v1227
    %1229 = vmatprep.subr.mxu0 0.0
    %v1230 = vand.u32 %v1182, 4294901760
    %1231 = vmatpush1.msra.mxu0 %v1230
    %1232 = vmatprep.subr.mxu0 0.0
    %v1233 = vand.u32 %v1183, 4294901760
    %1234 = vmatpush1.msra.mxu0 %v1233
    %1235 = vmatprep.subr.mxu0 0.0
    %v1236 = vand.u32 %v1184, 4294901760
    %1237 = vmatpush1.msra.mxu0 %v1236
    %1238 = vmatprep.subr.mxu0 0.0
    %v1239 = vand.u32 %v1185, 4294901760
    %1240 = vmatpush1.msra.mxu0 %v1239
    %1241 = vmatprep.subr.mxu0 0.0
    %v1242 = vand.u32 %v1186, 4294901760
    %1243 = vmatpush1.msra.mxu0 %v1242
    %1244 = vmatprep.subr.mxu0 0.0
    %v1245 = vand.u32 %v1187, 4294901760
    %1246 = vmatpush1.msra.mxu0 %v1245
    %1247 = vmatprep.subr.mxu0 0.0
    %v1248 = vand.u32 %v1188, 4294901760
    %1249 = vmatpush1.msra.mxu0 %v1248
    %1250 = vmatprep.subr.mxu0 0.0
    %1251 = vmatpush1.msra.mxu0 0.0
    %1252 = vmatprep.subr.mxu0 0.0
    %1253 = vmatpush1.msra.mxu0 0.0
    %1254 = vmatprep.subr.mxu0 0.0
    %1255 = vmatpush1.msra.mxu0 0.0
    %1256 = vmatprep.subr.mxu0 0.0
    %1257 = vmatpush1.msra.mxu0 0.0
    %1258 = vmatprep.subr.mxu0 0.0
    %1259 = vmatpush1.msra.mxu0 0.0
    %1260 = vmatprep.subr.mxu0 0.0
    %1261 = vmatpush1.msra.mxu0 0.0
    %1262 = vmatprep.subr.mxu0 0.0
    %1263 = vmatpush1.msra.mxu0 0.0
    %1264 = vmatprep.subr.mxu0 0.0
    %1265 = vmatpush1.msra.mxu0 0.0
    %1266 = vmatprep.subr.mxu0 0.0
    %1267 = vmatpush1.msra.mxu0 0.0
    %1268 = vmatprep.subr.mxu0 0.0
    %1269 = vmatpush1.msra.mxu0 0.0
    %1270 = vmatprep.subr.mxu0 0.0
    %1271 = vmatpush1.msra.mxu0 0.0
    %1272 = vmatprep.subr.mxu0 0.0
    %1273 = vmatpush1.msra.mxu0 0.0
    %1274 = vmatprep.subr.mxu0 0.0
    %1275 = vmatpush1.msra.mxu0 0.0
    %1276 = vmatprep.subr.mxu0 0.0
    %1277 = vmatpush1.msra.mxu0 0.0
    %1278 = vmatprep.subr.mxu0 0.0
    %1279 = vmatpush1.msra.mxu0 0.0
    %1280 = vmatprep.subr.mxu0 0.0
    %1281 = vmatpush1.msra.mxu0 0.0
    %1282 = vmatprep.subr.mxu0 0.0
    %1283 = vmatpush1.msra.mxu0 0.0
    %1284 = vmatprep.subr.mxu0 0.0
    %1285 = vmatpush1.msra.mxu0 0.0
    %1286 = vmatprep.subr.mxu0 0.0
    %1287 = vmatpush1.msra.mxu0 0.0
    %1288 = vmatprep.subr.mxu0 0.0
    %1289 = vmatpush1.msra.mxu0 0.0
    %1290 = vmatprep.subr.mxu0 0.0
    %1291 = vmatpush1.msra.mxu0 0.0
    %1292 = vmatprep.subr.mxu0 0.0
    %1293 = vmatpush1.msra.mxu0 0.0
    %1294 = vmatprep.subr.mxu0 0.0
    %1295 = vmatpush1.msra.mxu0 0.0
    %1296 = vmatprep.subr.mxu0 0.0
    %1297 = vmatpush1.msra.mxu0 0.0
    %1298 = vmatprep.mubr.f32.mxu0 0.0
    %v1299 = vand.u32 %v1215, 4294901760
    %v1300 = vsub.f32 %v1215, %v1299
    %v1301 = vand.u32 %v1300, 4294901760
    %v1302 = vsub.f32 %v1300, %v1301
    %v1303 = vand.u32 %v1302, 4294901760
    %1304 = vmatmul.mubr.f32.gmra.mrb[0].mxu0 %v1303
    %v1305 = vpop.f32.mrb[0].mxu0
    %v1306 = vadd.f32 %v1196, %v1305
    %v1307 = vpop.f32.mrb[0].mxu0
    %1308 = vmatprep.mubr.f32.mxu0 0.0
    %v1309 = vand.u32 %v1218, 4294901760
    %v1310 = vsub.f32 %v1218, %v1309
    %v1311 = vand.u32 %v1310, 4294901760
    %v1312 = vsub.f32 %v1310, %v1311
    %v1313 = vand.u32 %v1312, 4294901760
    %1314 = vmatmul.mubr.f32.gmra.mrb[0].mxu0 %v1313
    %v1315 = vpop.f32.mrb[0].mxu0
    %v1316 = vadd.f32 %v1201, %v1315
    %v1317 = vpop.f32.mrb[0].mxu0
    %1318 = vmatprep.mubr.f32.mxu0 0.0
    %v1319 = vand.u32 %v1221, 4294901760
    %v1320 = vsub.f32 %v1221, %v1319
    %v1321 = vand.u32 %v1320, 4294901760
    %v1322 = vsub.f32 %v1320, %v1321
    %v1323 = vand.u32 %v1322, 4294901760
    %1324 = vmatmul.mubr.f32.gmra.mrb[0].mxu0 %v1323
    %v1325 = vpop.f32.mrb[0].mxu0
    %v1326 = vadd.f32 %v1206, %v1325
    %v1327 = vpop.f32.mrb[0].mxu0
    %1328 = vmatprep.mubr.f32.mxu0 0.0
    %v1329 = vand.u32 %v1224, 4294901760
    %v1330 = vsub.f32 %v1224, %v1329
    %v1331 = vand.u32 %v1330, 4294901760
    %v1332 = vsub.f32 %v1330, %v1331
    %v1333 = vand.u32 %v1332, 4294901760
    %1334 = vmatmul.mubr.f32.gmra.mrb[0].mxu0 %v1333
    %v1335 = vpop.f32.mrb[0].mxu0
    %v1336 = vadd.f32 %v1211, %v1335
    %v1337 = vpop.f32.mrb[0].mxu0
    %1338 = vdwg.mxu0
    %1339 = vmatprep.subr.mxu0 0.0
    %v1340 = vand.u32 %v1181, 4294901760
    %v1341 = vsub.f32 %v1181, %v1340
    %v1342 = vand.u32 %v1341, 4294901760
    %v1343 = vsub.f32 %v1341, %v1342
    %v1344 = vand.u32 %v1343, 4294901760
    %1345 = vmatpush1.msra.mxu0 %v1344
    %1346 = vmatprep.subr.mxu0 0.0
    %v1347 = vand.u32 %v1182, 4294901760
    %v1348 = vsub.f32 %v1182, %v1347
    %v1349 = vand.u32 %v1348, 4294901760
    %v1350 = vsub.f32 %v1348, %v1349
    %v1351 = vand.u32 %v1350, 4294901760
    %1352 = vmatpush1.msra.mxu0 %v1351
    %1353 = vmatprep.subr.mxu0 0.0
    %v1354 = vand.u32 %v1183, 4294901760
    %v1355 = vsub.f32 %v1183, %v1354
    %v1356 = vand.u32 %v1355, 4294901760
    %v1357 = vsub.f32 %v1355, %v1356
    %v1358 = vand.u32 %v1357, 4294901760
    %1359 = vmatpush1.msra.mxu0 %v1358
    %1360 = vmatprep.subr.mxu0 0.0
    %v1361 = vand.u32 %v1184, 4294901760
    %v1362 = vsub.f32 %v1184, %v1361
    %v1363 = vand.u32 %v1362, 4294901760
    %v1364 = vsub.f32 %v1362, %v1363
    %v1365 = vand.u32 %v1364, 4294901760
    %1366 = vmatpush1.msra.mxu0 %v1365
    %1367 = vmatprep.subr.mxu0 0.0
    %v1368 = vand.u32 %v1185, 4294901760
    %v1369 = vsub.f32 %v1185, %v1368
    %v1370 = vand.u32 %v1369, 4294901760
    %v1371 = vsub.f32 %v1369, %v1370
    %v1372 = vand.u32 %v1371, 4294901760
    %1373 = vmatpush1.msra.mxu0 %v1372
    %1374 = vmatprep.subr.mxu0 0.0
    %v1375 = vand.u32 %v1186, 4294901760
    %v1376 = vsub.f32 %v1186, %v1375
    %v1377 = vand.u32 %v1376, 4294901760
    %v1378 = vsub.f32 %v1376, %v1377
    %v1379 = vand.u32 %v1378, 4294901760
    %1380 = vmatpush1.msra.mxu0 %v1379
    %1381 = vmatprep.subr.mxu0 0.0
    %v1382 = vand.u32 %v1187, 4294901760
    %v1383 = vsub.f32 %v1187, %v1382
    %v1384 = vand.u32 %v1383, 4294901760
    %v1385 = vsub.f32 %v1383, %v1384
    %v1386 = vand.u32 %v1385, 4294901760
    %1387 = vmatpush1.msra.mxu0 %v1386
    %1388 = vmatprep.subr.mxu0 0.0
    %v1389 = vand.u32 %v1188, 4294901760
    %v1390 = vsub.f32 %v1188, %v1389
    %v1391 = vand.u32 %v1390, 4294901760
    %v1392 = vsub.f32 %v1390, %v1391
    %v1393 = vand.u32 %v1392, 4294901760
    %1394 = vmatpush1.msra.mxu0 %v1393
    %1395 = vmatprep.subr.mxu0 0.0
    %1396 = vmatpush1.msra.mxu0 0.0
    %1397 = vmatprep.subr.mxu0 0.0
    %1398 = vmatpush1.msra.mxu0 0.0
    %1399 = vmatprep.subr.mxu0 0.0
    %1400 = vmatpush1.msra.mxu0 0.0
    %1401 = vmatprep.subr.mxu0 0.0
    %1402 = vmatpush1.msra.mxu0 0.0
    %1403 = vmatprep.subr.mxu0 0.0
    %1404 = vmatpush1.msra.mxu0 0.0
    %1405 = vmatprep.subr.mxu0 0.0
    %1406 = vmatpush1.msra.mxu0 0.0
    %1407 = vmatprep.subr.mxu0 0.0
    %1408 = vmatpush1.msra.mxu0 0.0
    %1409 = vmatprep.subr.mxu0 0.0
    %1410 = vmatpush1.msra.mxu0 0.0
    %1411 = vmatprep.subr.mxu0 0.0
    %1412 = vmatpush1.msra.mxu0 0.0
    %1413 = vmatprep.subr.mxu0 0.0
    %1414 = vmatpush1.msra.mxu0 0.0
    %1415 = vmatprep.subr.mxu0 0.0
    %1416 = vmatpush1.msra.mxu0 0.0
    %1417 = vmatprep.subr.mxu0 0.0
    %1418 = vmatpush1.msra.mxu0 0.0
    %1419 = vmatprep.subr.mxu0 0.0
    %1420 = vmatpush1.msra.mxu0 0.0
    %1421 = vmatprep.subr.mxu0 0.0
    %1422 = vmatpush1.msra.mxu0 0.0
    %1423 = vmatprep.subr.mxu0 0.0
    %1424 = vmatpush1.msra.mxu0 0.0
    %1425 = vmatprep.subr.mxu0 0.0
    %1426 = vmatpush1.msra.mxu0 0.0
    %1427 = vmatprep.subr.mxu0 0.0
    %1428 = vmatpush1.msra.mxu0 0.0
    %1429 = vmatprep.subr.mxu0 0.0
    %1430 = vmatpush1.msra.mxu0 0.0
    %1431 = vmatprep.subr.mxu0 0.0
    %1432 = vmatpush1.msra.mxu0 0.0
    %1433 = vmatprep.subr.mxu0 0.0
    %1434 = vmatpush1.msra.mxu0 0.0
    %1435 = vmatprep.subr.mxu0 0.0
    %1436 = vmatpush1.msra.mxu0 0.0
    %1437 = vmatprep.subr.mxu0 0.0
    %1438 = vmatpush1.msra.mxu0 0.0
    %1439 = vmatprep.subr.mxu0 0.0
    %1440 = vmatpush1.msra.mxu0 0.0
    %1441 = vmatprep.subr.mxu0 0.0
    %1442 = vmatpush1.msra.mxu0 0.0
    %1443 = vmatprep.mubr.f32.mxu0 0.0
    %v1444 = vand.u32 %v1215, 4294901760
    %1445 = vmatmul.mubr.f32.gmra.mrb[0].mxu0 %v1444
    %v1446 = vpop.f32.mrb[0].mxu0
    %v1447 = vadd.f32 %v1306, %v1446
    %v1448 = vpop.f32.mrb[0].mxu0
    %1449 = vmatprep.mubr.f32.mxu0 0.0
    %v1450 = vand.u32 %v1218, 4294901760
    %1451 = vmatmul.mubr.f32.gmra.mrb[0].mxu0 %v1450
    %v1452 = vpop.f32.mrb[0].mxu0
    %v1453 = vadd.f32 %v1316, %v1452
    %v1454 = vpop.f32.mrb[0].mxu0
    %1455 = vmatprep.mubr.f32.mxu0 0.0
    %v1456 = vand.u32 %v1221, 4294901760
    %1457 = vmatmul.mubr.f32.gmra.mrb[0].mxu0 %v1456
    %v1458 = vpop.f32.mrb[0].mxu0
    %v1459 = vadd.f32 %v1326, %v1458
    %v1460 = vpop.f32.mrb[0].mxu0
    %1461 = vmatprep.mubr.f32.mxu0 0.0
    %v1462 = vand.u32 %v1224, 4294901760
    %1463 = vmatmul.mubr.f32.gmra.mrb[0].mxu0 %v1462
    %v1464 = vpop.f32.mrb[0].mxu0
    %v1465 = vadd.f32 %v1336, %v1464
    %v1466 = vpop.f32.mrb[0].mxu0
    %1467 = vdwg.mxu0
    %1468 = vmatprep.subr.mxu0 0.0
    %v1469 = vand.u32 %v1181, 4294901760
    %v1470 = vsub.f32 %v1181, %v1469
    %1471 = vmatpush1.msra.mxu0 %v1470
    %1472 = vmatprep.subr.mxu0 0.0
    %v1473 = vand.u32 %v1182, 4294901760
    %v1474 = vsub.f32 %v1182, %v1473
    %1475 = vmatpush1.msra.mxu0 %v1474
    %1476 = vmatprep.subr.mxu0 0.0
    %v1477 = vand.u32 %v1183, 4294901760
    %v1478 = vsub.f32 %v1183, %v1477
    %1479 = vmatpush1.msra.mxu0 %v1478
    %1480 = vmatprep.subr.mxu0 0.0
    %v1481 = vand.u32 %v1184, 4294901760
    %v1482 = vsub.f32 %v1184, %v1481
    %1483 = vmatpush1.msra.mxu0 %v1482
    %1484 = vmatprep.subr.mxu0 0.0
    %v1485 = vand.u32 %v1185, 4294901760
    %v1486 = vsub.f32 %v1185, %v1485
    %1487 = vmatpush1.msra.mxu0 %v1486
    %1488 = vmatprep.subr.mxu0 0.0
    %v1489 = vand.u32 %v1186, 4294901760
    %v1490 = vsub.f32 %v1186, %v1489
    %1491 = vmatpush1.msra.mxu0 %v1490
    %1492 = vmatprep.subr.mxu0 0.0
    %v1493 = vand.u32 %v1187, 4294901760
    %v1494 = vsub.f32 %v1187, %v1493
    %1495 = vmatpush1.msra.mxu0 %v1494
    %1496 = vmatprep.subr.mxu0 0.0
    %v1497 = vand.u32 %v1188, 4294901760
    %v1498 = vsub.f32 %v1188, %v1497
    %1499 = vmatpush1.msra.mxu0 %v1498
    %1500 = vmatprep.subr.mxu0 0.0
    %1501 = vmatpush1.msra.mxu0 0.0
    %1502 = vmatprep.subr.mxu0 0.0
    %1503 = vmatpush1.msra.mxu0 0.0
    %1504 = vmatprep.subr.mxu0 0.0
    %1505 = vmatpush1.msra.mxu0 0.0
    %1506 = vmatprep.subr.mxu0 0.0
    %1507 = vmatpush1.msra.mxu0 0.0
    %1508 = vmatprep.subr.mxu0 0.0
    %1509 = vmatpush1.msra.mxu0 0.0
    %1510 = vmatprep.subr.mxu0 0.0
    %1511 = vmatpush1.msra.mxu0 0.0
    %1512 = vmatprep.subr.mxu0 0.0
    %1513 = vmatpush1.msra.mxu0 0.0
    %1514 = vmatprep.subr.mxu0 0.0
    %1515 = vmatpush1.msra.mxu0 0.0
    %1516 = vmatprep.subr.mxu0 0.0
    %1517 = vmatpush1.msra.mxu0 0.0
    %1518 = vmatprep.subr.mxu0 0.0
    %1519 = vmatpush1.msra.mxu0 0.0
    %1520 = vmatprep.subr.mxu0 0.0
    %1521 = vmatpush1.msra.mxu0 0.0
    %1522 = vmatprep.subr.mxu0 0.0
    %1523 = vmatpush1.msra.mxu0 0.0
    %1524 = vmatprep.subr.mxu0 0.0
    %1525 = vmatpush1.msra.mxu0 0.0
    %1526 = vmatprep.subr.mxu0 0.0
    %1527 = vmatpush1.msra.mxu0 0.0
    %1528 = vmatprep.subr.mxu0 0.0
    %1529 = vmatpush1.msra.mxu0 0.0
    %1530 = vmatprep.subr.mxu0 0.0
    %1531 = vmatpush1.msra.mxu0 0.0
    %1532 = vmatprep.subr.mxu0 0.0
    %1533 = vmatpush1.msra.mxu0 0.0
    %1534 = vmatprep.subr.mxu0 0.0
    %1535 = vmatpush1.msra.mxu0 0.0
    %1536 = vmatprep.subr.mxu0 0.0
    %1537 = vmatpush1.msra.mxu0 0.0
    %1538 = vmatprep.subr.mxu0 0.0
    %1539 = vmatpush1.msra.mxu0 0.0
    %1540 = vmatprep.subr.mxu0 0.0
    %1541 = vmatpush1.msra.mxu0 0.0
    %1542 = vmatprep.subr.mxu0 0.0
    %1543 = vmatpush1.msra.mxu0 0.0
    %1544 = vmatprep.subr.mxu0 0.0
    %1545 = vmatpush1.msra.mxu0 0.0
    %1546 = vmatprep.subr.mxu0 0.0
    %1547 = vmatpush1.msra.mxu0 0.0
    %1548 = vmatprep.mubr.f32.mxu0 0.0
    %v1549 = vand.u32 %v1215, 4294901760
    %v1550 = vsub.f32 %v1215, %v1549
    %1551 = vmatmul.mubr.f32.gmra.mrb[0].mxu0 %v1550
    %v1552 = vpop.f32.mrb[0].mxu0
    %v1553 = vadd.f32 %v1447, %v1552
    %v1554 = vpop.f32.mrb[0].mxu0
    %1555 = vmatprep.mubr.f32.mxu0 0.0
    %v1556 = vand.u32 %v1218, 4294901760
    %v1557 = vsub.f32 %v1218, %v1556
    %1558 = vmatmul.mubr.f32.gmra.mrb[0].mxu0 %v1557
    %v1559 = vpop.f32.mrb[0].mxu0
    %v1560 = vadd.f32 %v1453, %v1559
    %v1561 = vpop.f32.mrb[0].mxu0
    %1562 = vmatprep.mubr.f32.mxu0 0.0
    %v1563 = vand.u32 %v1221, 4294901760
    %v1564 = vsub.f32 %v1221, %v1563
    %1565 = vmatmul.mubr.f32.gmra.mrb[0].mxu0 %v1564
    %v1566 = vpop.f32.mrb[0].mxu0
    %v1567 = vadd.f32 %v1459, %v1566
    %v1568 = vpop.f32.mrb[0].mxu0
    %1569 = vmatprep.mubr.f32.mxu0 0.0
    %v1570 = vand.u32 %v1224, 4294901760
    %v1571 = vsub.f32 %v1224, %v1570
    %1572 = vmatmul.mubr.f32.gmra.mrb[0].mxu0 %v1571
    %v1573 = vpop.f32.mrb[0].mxu0
    %v1574 = vadd.f32 %v1465, %v1573
    %v1575 = vpop.f32.mrb[0].mxu0
    %1576 = vdwg.mxu0
    %1577 = vmatprep.subr.mxu0 0.0
    %v1578 = vand.u32 %v1181, 4294901760
    %1579 = vmatpush1.msra.mxu0 %v1578
    %1580 = vmatprep.subr.mxu0 0.0
    %v1581 = vand.u32 %v1182, 4294901760
    %1582 = vmatpush1.msra.mxu0 %v1581
    %1583 = vmatprep.subr.mxu0 0.0
    %v1584 = vand.u32 %v1183, 4294901760
    %1585 = vmatpush1.msra.mxu0 %v1584
    %1586 = vmatprep.subr.mxu0 0.0
    %v1587 = vand.u32 %v1184, 4294901760
    %1588 = vmatpush1.msra.mxu0 %v1587
    %1589 = vmatprep.subr.mxu0 0.0
    %v1590 = vand.u32 %v1185, 4294901760
    %1591 = vmatpush1.msra.mxu0 %v1590
    %1592 = vmatprep.subr.mxu0 0.0
    %v1593 = vand.u32 %v1186, 4294901760
    %1594 = vmatpush1.msra.mxu0 %v1593
    %1595 = vmatprep.subr.mxu0 0.0
    %v1596 = vand.u32 %v1187, 4294901760
    %1597 = vmatpush1.msra.mxu0 %v1596
    %1598 = vmatprep.subr.mxu0 0.0
    %v1599 = vand.u32 %v1188, 4294901760
    %1600 = vmatpush1.msra.mxu0 %v1599
    %1601 = vmatprep.subr.mxu0 0.0
    %1602 = vmatpush1.msra.mxu0 0.0
    %1603 = vmatprep.subr.mxu0 0.0
    %1604 = vmatpush1.msra.mxu0 0.0
    %1605 = vmatprep.subr.mxu0 0.0
    %1606 = vmatpush1.msra.mxu0 0.0
    %1607 = vmatprep.subr.mxu0 0.0
    %1608 = vmatpush1.msra.mxu0 0.0
    %1609 = vmatprep.subr.mxu0 0.0
    %1610 = vmatpush1.msra.mxu0 0.0
    %1611 = vmatprep.subr.mxu0 0.0
    %1612 = vmatpush1.msra.mxu0 0.0
    %1613 = vmatprep.subr.mxu0 0.0
    %1614 = vmatpush1.msra.mxu0 0.0
    %1615 = vmatprep.subr.mxu0 0.0
    %1616 = vmatpush1.msra.mxu0 0.0
    %1617 = vmatprep.subr.mxu0 0.0
    %1618 = vmatpush1.msra.mxu0 0.0
    %1619 = vmatprep.subr.mxu0 0.0
    %1620 = vmatpush1.msra.mxu0 0.0
    %1621 = vmatprep.subr.mxu0 0.0
    %1622 = vmatpush1.msra.mxu0 0.0
    %1623 = vmatprep.subr.mxu0 0.0
    %1624 = vmatpush1.msra.mxu0 0.0
    %1625 = vmatprep.subr.mxu0 0.0
    %1626 = vmatpush1.msra.mxu0 0.0
    %1627 = vmatprep.subr.mxu0 0.0
    %1628 = vmatpush1.msra.mxu0 0.0
    %1629 = vmatprep.subr.mxu0 0.0
    %1630 = vmatpush1.msra.mxu0 0.0
    %1631 = vmatprep.subr.mxu0 0.0
    %1632 = vmatpush1.msra.mxu0 0.0
    %1633 = vmatprep.subr.mxu0 0.0
    %1634 = vmatpush1.msra.mxu0 0.0
    %1635 = vmatprep.subr.mxu0 0.0
    %1636 = vmatpush1.msra.mxu0 0.0
    %1637 = vmatprep.subr.mxu0 0.0
    %1638 = vmatpush1.msra.mxu0 0.0
    %1639 = vmatprep.subr.mxu0 0.0
    %1640 = vmatpush1.msra.mxu0 0.0
    %1641 = vmatprep.subr.mxu0 0.0
    %1642 = vmatpush1.msra.mxu0 0.0
    %1643 = vmatprep.subr.mxu0 0.0
    %1644 = vmatpush1.msra.mxu0 0.0
    %1645 = vmatprep.subr.mxu0 0.0
    %1646 = vmatpush1.msra.mxu0 0.0
    %1647 = vmatprep.subr.mxu0 0.0
    %1648 = vmatpush1.msra.mxu0 0.0
    %1649 = vmatprep.mubr.f32.mxu0 0.0
    %v1650 = vand.u32 %v1215, 4294901760
    %v1651 = vsub.f32 %v1215, %v1650
    %v1652 = vand.u32 %v1651, 4294901760
    %1653 = vmatmul.mubr.f32.gmra.mrb[0].mxu0 %v1652
    %v1654 = vpop.f32.mrb[0].mxu0
    %v1655 = vadd.f32 %v1553, %v1654
    %v1656 = vpop.f32.mrb[0].mxu0
    %1657 = vmatprep.mubr.f32.mxu0 0.0
    %v1658 = vand.u32 %v1218, 4294901760
    %v1659 = vsub.f32 %v1218, %v1658
    %v1660 = vand.u32 %v1659, 4294901760
    %1661 = vmatmul.mubr.f32.gmra.mrb[0].mxu0 %v1660
    %v1662 = vpop.f32.mrb[0].mxu0
    %v1663 = vadd.f32 %v1560, %v1662
    %v1664 = vpop.f32.mrb[0].mxu0
    %1665 = vmatprep.mubr.f32.mxu0 0.0
    %v1666 = vand.u32 %v1221, 4294901760
    %v1667 = vsub.f32 %v1221, %v1666
    %v1668 = vand.u32 %v1667, 4294901760
    %1669 = vmatmul.mubr.f32.gmra.mrb[0].mxu0 %v1668
    %v1670 = vpop.f32.mrb[0].mxu0
    %v1671 = vadd.f32 %v1567, %v1670
    %v1672 = vpop.f32.mrb[0].mxu0
    %1673 = vmatprep.mubr.f32.mxu0 0.0
    %v1674 = vand.u32 %v1224, 4294901760
    %v1675 = vsub.f32 %v1224, %v1674
    %v1676 = vand.u32 %v1675, 4294901760
    %1677 = vmatmul.mubr.f32.gmra.mrb[0].mxu0 %v1676
    %v1678 = vpop.f32.mrb[0].mxu0
    %v1679 = vadd.f32 %v1574, %v1678
    %v1680 = vpop.f32.mrb[0].mxu0
    %1681 = vdwg.mxu0
    %1682 = vmatprep.subr.mxu0 0.0
    %v1683 = vand.u32 %v1181, 4294901760
    %v1684 = vsub.f32 %v1181, %v1683
    %v1685 = vand.u32 %v1684, 4294901760
    %1686 = vmatpush1.msra.mxu0 %v1685
    %1687 = vmatprep.subr.mxu0 0.0
    %v1688 = vand.u32 %v1182, 4294901760
    %v1689 = vsub.f32 %v1182, %v1688
    %v1690 = vand.u32 %v1689, 4294901760
    %1691 = vmatpush1.msra.mxu0 %v1690
    %1692 = vmatprep.subr.mxu0 0.0
    %v1693 = vand.u32 %v1183, 4294901760
    %v1694 = vsub.f32 %v1183, %v1693
    %v1695 = vand.u32 %v1694, 4294901760
    %1696 = vmatpush1.msra.mxu0 %v1695
    %1697 = vmatprep.subr.mxu0 0.0
    %v1698 = vand.u32 %v1184, 4294901760
    %v1699 = vsub.f32 %v1184, %v1698
    %v1700 = vand.u32 %v1699, 4294901760
    %1701 = vmatpush1.msra.mxu0 %v1700
    %1702 = vmatprep.subr.mxu0 0.0
    %v1703 = vand.u32 %v1185, 4294901760
    %v1704 = vsub.f32 %v1185, %v1703
    %v1705 = vand.u32 %v1704, 4294901760
    %1706 = vmatpush1.msra.mxu0 %v1705
    %1707 = vmatprep.subr.mxu0 0.0
    %v1708 = vand.u32 %v1186, 4294901760
    %v1709 = vsub.f32 %v1186, %v1708
    %v1710 = vand.u32 %v1709, 4294901760
    %1711 = vmatpush1.msra.mxu0 %v1710
    %1712 = vmatprep.subr.mxu0 0.0
    %v1713 = vand.u32 %v1187, 4294901760
    %v1714 = vsub.f32 %v1187, %v1713
    %v1715 = vand.u32 %v1714, 4294901760
    %1716 = vmatpush1.msra.mxu0 %v1715
    %1717 = vmatprep.subr.mxu0 0.0
    %v1718 = vand.u32 %v1188, 4294901760
    %v1719 = vsub.f32 %v1188, %v1718
    %v1720 = vand.u32 %v1719, 4294901760
    %1721 = vmatpush1.msra.mxu0 %v1720
    %1722 = vmatprep.subr.mxu0 0.0
    %1723 = vmatpush1.msra.mxu0 0.0
    %1724 = vmatprep.subr.mxu0 0.0
    %1725 = vmatpush1.msra.mxu0 0.0
    %1726 = vmatprep.subr.mxu0 0.0
    %1727 = vmatpush1.msra.mxu0 0.0
    %1728 = vmatprep.subr.mxu0 0.0
    %1729 = vmatpush1.msra.mxu0 0.0
    %1730 = vmatprep.subr.mxu0 0.0
    %1731 = vmatpush1.msra.mxu0 0.0
    %1732 = vmatprep.subr.mxu0 0.0
    %1733 = vmatpush1.msra.mxu0 0.0
    %1734 = vmatprep.subr.mxu0 0.0
    %1735 = vmatpush1.msra.mxu0 0.0
    %1736 = vmatprep.subr.mxu0 0.0
    %1737 = vmatpush1.msra.mxu0 0.0
    %1738 = vmatprep.subr.mxu0 0.0
    %1739 = vmatpush1.msra.mxu0 0.0
    %1740 = vmatprep.subr.mxu0 0.0
    %1741 = vmatpush1.msra.mxu0 0.0
    %1742 = vmatprep.subr.mxu0 0.0
    %1743 = vmatpush1.msra.mxu0 0.0
    %1744 = vmatprep.subr.mxu0 0.0
    %1745 = vmatpush1.msra.mxu0 0.0
    %1746 = vmatprep.subr.mxu0 0.0
    %1747 = vmatpush1.msra.mxu0 0.0
    %1748 = vmatprep.subr.mxu0 0.0
    %1749 = vmatpush1.msra.mxu0 0.0
    %1750 = vmatprep.subr.mxu0 0.0
    %1751 = vmatpush1.msra.mxu0 0.0
    %1752 = vmatprep.subr.mxu0 0.0
    %1753 = vmatpush1.msra.mxu0 0.0
    %1754 = vmatprep.subr.mxu0 0.0
    %1755 = vmatpush1.msra.mxu0 0.0
    %1756 = vmatprep.subr.mxu0 0.0
    %1757 = vmatpush1.msra.mxu0 0.0
    %1758 = vmatprep.subr.mxu0 0.0
    %1759 = vmatpush1.msra.mxu0 0.0
    %1760 = vmatprep.subr.mxu0 0.0
    %1761 = vmatpush1.msra.mxu0 0.0
    %1762 = vmatprep.subr.mxu0 0.0
    %1763 = vmatpush1.msra.mxu0 0.0
    %1764 = vmatprep.subr.mxu0 0.0
    %1765 = vmatpush1.msra.mxu0 0.0
    %1766 = vmatprep.subr.mxu0 0.0
    %1767 = vmatpush1.msra.mxu0 0.0
    %1768 = vmatprep.subr.mxu0 0.0
    %1769 = vmatpush1.msra.mxu0 0.0
    %1770 = vmatprep.mubr.f32.mxu0 0.0
    %v1771 = vand.u32 %v1215, 4294901760
    %1772 = vmatmul.mubr.f32.gmra.mrb[0].mxu0 %v1771
    %v1773 = vpop.f32.mrb[0].mxu0
    %v1774 = vadd.f32 %v1655, %v1773
    %v1775 = vpop.f32.mrb[0].mxu0
    %1776 = vmatprep.mubr.f32.mxu0 0.0
    %v1777 = vand.u32 %v1218, 4294901760
    %1778 = vmatmul.mubr.f32.gmra.mrb[0].mxu0 %v1777
    %v1779 = vpop.f32.mrb[0].mxu0
    %v1780 = vadd.f32 %v1663, %v1779
    %v1781 = vpop.f32.mrb[0].mxu0
    %1782 = vmatprep.mubr.f32.mxu0 0.0
    %v1783 = vand.u32 %v1221, 4294901760
    %1784 = vmatmul.mubr.f32.gmra.mrb[0].mxu0 %v1783
    %v1785 = vpop.f32.mrb[0].mxu0
    %v1786 = vadd.f32 %v1671, %v1785
    %v1787 = vpop.f32.mrb[0].mxu0
    %1788 = vmatprep.mubr.f32.mxu0 0.0
    %v1789 = vand.u32 %v1224, 4294901760
    %1790 = vmatmul.mubr.f32.gmra.mrb[0].mxu0 %v1789
    %v1791 = vpop.f32.mrb[0].mxu0
    %v1792 = vadd.f32 %v1679, %v1791
    %v1793 = vpop.f32.mrb[0].mxu0
    %1794 = vdwg.mxu0
    %1795 = vmatprep.subr.mxu0 0.0
    %v1796 = vand.u32 %v1181, 4294901760
    %1797 = vmatpush1.msra.mxu0 %v1796
    %1798 = vmatprep.subr.mxu0 0.0
    %v1799 = vand.u32 %v1182, 4294901760
    %1800 = vmatpush1.msra.mxu0 %v1799
    %1801 = vmatprep.subr.mxu0 0.0
    %v1802 = vand.u32 %v1183, 4294901760
    %1803 = vmatpush1.msra.mxu0 %v1802
    %1804 = vmatprep.subr.mxu0 0.0
    %v1805 = vand.u32 %v1184, 4294901760
    %1806 = vmatpush1.msra.mxu0 %v1805
    %1807 = vmatprep.subr.mxu0 0.0
    %v1808 = vand.u32 %v1185, 4294901760
    %1809 = vmatpush1.msra.mxu0 %v1808
    %1810 = vmatprep.subr.mxu0 0.0
    %v1811 = vand.u32 %v1186, 4294901760
    %1812 = vmatpush1.msra.mxu0 %v1811
    %1813 = vmatprep.subr.mxu0 0.0
    %v1814 = vand.u32 %v1187, 4294901760
    %1815 = vmatpush1.msra.mxu0 %v1814
    %1816 = vmatprep.subr.mxu0 0.0
    %v1817 = vand.u32 %v1188, 4294901760
    %1818 = vmatpush1.msra.mxu0 %v1817
    %1819 = vmatprep.subr.mxu0 0.0
    %1820 = vmatpush1.msra.mxu0 0.0
    %1821 = vmatprep.subr.mxu0 0.0
    %1822 = vmatpush1.msra.mxu0 0.0
    %1823 = vmatprep.subr.mxu0 0.0
    %1824 = vmatpush1.msra.mxu0 0.0
    %1825 = vmatprep.subr.mxu0 0.0
    %1826 = vmatpush1.msra.mxu0 0.0
    %1827 = vmatprep.subr.mxu0 0.0
    %1828 = vmatpush1.msra.mxu0 0.0
    %1829 = vmatprep.subr.mxu0 0.0
    %1830 = vmatpush1.msra.mxu0 0.0
    %1831 = vmatprep.subr.mxu0 0.0
    %1832 = vmatpush1.msra.mxu0 0.0
    %1833 = vmatprep.subr.mxu0 0.0
    %1834 = vmatpush1.msra.mxu0 0.0
    %1835 = vmatprep.subr.mxu0 0.0
    %1836 = vmatpush1.msra.mxu0 0.0
    %1837 = vmatprep.subr.mxu0 0.0
    %1838 = vmatpush1.msra.mxu0 0.0
    %1839 = vmatprep.subr.mxu0 0.0
    %1840 = vmatpush1.msra.mxu0 0.0
    %1841 = vmatprep.subr.mxu0 0.0
    %1842 = vmatpush1.msra.mxu0 0.0
    %1843 = vmatprep.subr.mxu0 0.0
    %1844 = vmatpush1.msra.mxu0 0.0
    %1845 = vmatprep.subr.mxu0 0.0
    %1846 = vmatpush1.msra.mxu0 0.0
    %1847 = vmatprep.subr.mxu0 0.0
    %1848 = vmatpush1.msra.mxu0 0.0
    %1849 = vmatprep.subr.mxu0 0.0
    %1850 = vmatpush1.msra.mxu0 0.0
    %1851 = vmatprep.subr.mxu0 0.0
    %1852 = vmatpush1.msra.mxu0 0.0
    %1853 = vmatprep.subr.mxu0 0.0
    %1854 = vmatpush1.msra.mxu0 0.0
    %1855 = vmatprep.subr.mxu0 0.0
    %1856 = vmatpush1.msra.mxu0 0.0
    %1857 = vmatprep.subr.mxu0 0.0
    %1858 = vmatpush1.msra.mxu0 0.0
    %1859 = vmatprep.subr.mxu0 0.0
    %1860 = vmatpush1.msra.mxu0 0.0
    %1861 = vmatprep.subr.mxu0 0.0
    %1862 = vmatpush1.msra.mxu0 0.0
    %1863 = vmatprep.subr.mxu0 0.0
    %1864 = vmatpush1.msra.mxu0 0.0
    %1865 = vmatprep.subr.mxu0 0.0
    %1866 = vmatpush1.msra.mxu0 0.0
    %1867 = vmatprep.mubr.f32.mxu0 0.0
    %v1868 = vand.u32 %v1215, 4294901760
    %1869 = vmatmul.mubr.f32.gmra.mrb[0].mxu0 %v1868
    %v1870 = vpop.f32.mrb[0].mxu0
    %v1871 = vadd.f32 %v1774, %v1870
    %v1872 = vpop.f32.mrb[0].mxu0
    %1873 = vmatprep.mubr.f32.mxu0 0.0
    %v1874 = vand.u32 %v1218, 4294901760
    %1875 = vmatmul.mubr.f32.gmra.mrb[0].mxu0 %v1874
    %v1876 = vpop.f32.mrb[0].mxu0
    %v1877 = vadd.f32 %v1780, %v1876
    %v1878 = vpop.f32.mrb[0].mxu0
    %1879 = vmatprep.mubr.f32.mxu0 0.0
    %v1880 = vand.u32 %v1221, 4294901760
    %1881 = vmatmul.mubr.f32.gmra.mrb[0].mxu0 %v1880
    %v1882 = vpop.f32.mrb[0].mxu0
    %v1883 = vadd.f32 %v1786, %v1882
    %v1884 = vpop.f32.mrb[0].mxu0
    %1885 = vmatprep.mubr.f32.mxu0 0.0
    %v1886 = vand.u32 %v1224, 4294901760
    %1887 = vmatmul.mubr.f32.gmra.mrb[0].mxu0 %v1886
    %v1888 = vpop.f32.mrb[0].mxu0
    %v1889 = vadd.f32 %v1792, %v1888
    %v1890 = vpop.f32.mrb[0].mxu0
    %1891 = vdwg.mxu0
    %v1892 = vmax.f32 %v1871, 0.0
    %v1893 = vmax.f32 %v1877, 0.0
    %v1894 = vmax.f32 %v1883, 0.0
    %v1895 = vmax.f32 %v1889, 0.0
    %v1896 = vld [vmem:[#allocation8] sm:$0xff]
    %v1897 = vld [vmem:[#allocation8 + $0x8] sm:$0xff]
    %v1898 = vld [vmem:[#allocation8 + $0x10] sm:$0xff]
    %v1899 = vld [vmem:[#allocation8 + $0x18] sm:$0xff]
    %1901 = vset.pattern.permute.xlu0 0
    %1902 = vperm.xlu0 %1901, %v1896
    %v1903 = vpop.permute.xlu0 %1902
    %1906 = vset.pattern.permute.xlu0 0
    %1907 = vperm.xlu0 %1906, %v1897
    %v1908 = vpop.permute.xlu0 %1907
    %1911 = vset.pattern.permute.xlu0 0
    %1912 = vperm.xlu0 %1911, %v1898
    %v1913 = vpop.permute.xlu0 %1912
    %1916 = vset.pattern.permute.xlu0 0
    %1917 = vperm.xlu0 %1916, %v1899
    %v1918 = vpop.permute.xlu0 %1917
    %v1920 = vmul.f32 %v1892, %v1903
    %v1921 = vmul.f32 %v1893, %v1908
    %v1922 = vmul.f32 %v1894, %v1913
    %v1923 = vmul.f32 %v1895, %v1918
    %v1924 = vadd.f32 %v1920, %v1921
    %v1925 = vadd.f32 %v1924, %v1922
    %v1926 = vadd.f32 %v1925, %v1923
    %v1927 = vrot.slane %v1926, 4
    %v1928 = vadd.f32 %v1926, %v1927
    %v1929 = vrot.slane %v1928, 2
    %v1930 = vadd.f32 %v1928, %v1929
    %v1931 = vrot.slane %v1930, 1
    %v1932 = vadd.f32 %v1930, %v1931
    %1934 = vset.pattern.permute.xlu0 0
    %1935 = vperm.xlu0 %1934, %v117
    %v1936 = vpop.permute.xlu0 %1935
    %v1938 = vadd.f32 %v1932, %v1936
    %1939 = vst [vmem:[#allocation11] sm:$0x1] %v1938
    // Predicated region
    $region42: #{complexity_predictor_forward.1} parent=1 // pred_check
      _
    $region43: #{complexity_predictor_forward.1} parent=1 // pred_check_branch
      %1941 = sbr.rel (0) target = $region45
    $region44: #{complexity_predictor_forward.1} parent=1 // pred_region
      %s1943 = ssub.s32 16, 16
      %1944 = vsyncadd [#allocation4], %s1943
      %s1946 = sshll.u32 [#allocation11], 4
      %s1947 = int_to_ptr.vmem [resolvable:$true] %s1946
      %1949 = dma.vmem_to_hbm [thread:$0]  %s1947, 16, %s5, [#allocation4]
    $region45: #{complexity_predictor_forward.1} parent=1 // pred_fallthru
      _
    // Predicated region
    $region46: #{complexity_predictor_forward.1} parent=1 // pred_check
      _
    $region47: #{complexity_predictor_forward.1} parent=1 // pred_check_branch
      %1951 = sbr.rel (0) target = $region49
    $region48: #{complexity_predictor_forward.1} parent=1 // pred_region
      %1952 = dma.done [#allocation4], 16
    $region49: #{complexity_predictor_forward.1} parent=1 // pred_fallthru
      _
    %1953 = vsyncpa [#allocation3], 1
    %1954 = vsyncpa [#allocation6], 1
    %1955 = vsyncpa [#allocation9], 1
    %1956 = vsyncpa [#allocation4], 1

</llo_original>
